<compile_context>
chip_gen: v7x
topology: tpu7x:2x2x1
jax: 0.10.0
libtpu: 0.0.40
codegen_flags: <defaults>
</compile_context>

<pallas_src>
import jax
import jax.numpy as jnp
from jax.experimental import pallas as pl
from jax.experimental.pallas import tpu as pltpu

BN_EPS = 1e-5
IN_RAW = 784       # 28*28*1
IN_PAD = 896       # 7 * 128 (zero-padded K dim of the first matmul)
OUT_RAW = 10
OUT_PAD = 128      # lane-dense output width


def _batchnorm_train(h, gb):
    """BatchNorm1d training mode: biased batch variance, eps inside rsqrt.

    Single-pass fused statistics (sum and sum-of-squares together) to halve
    the XLU reduction count per layer. gb is (2, C): row 0 = gamma, row 1 = beta.
    """
    gamma = gb[0:1, :]
    beta = gb[1:2, :]
    mean = jnp.mean(h, axis=0, keepdims=True)
    meansq = jnp.mean(h * h, axis=0, keepdims=True)
    var = jnp.maximum(meansq - mean * mean, 0.0)   # guard tiny negative cancellation
    return (h - mean) * jax.lax.rsqrt(var + BN_EPS) * gamma + beta


def mlp_kernel(x_ref, w1_ref, gb1_ref, w2_ref, gb2_ref, w3_ref, gb3_ref, o_ref):
    # Input downcast happens here, on the VMEM tile (weights arrive as bf16).
    x = x_ref[...].astype(jnp.bfloat16)                         # (B, 896)

    # hidden1 + BN  (bf16 x bf16 MXU matmul, f32 accumulate)
    h = jnp.dot(x, w1_ref[...], preferred_element_type=jnp.float32)
    h = _batchnorm_train(h, gb1_ref[...])                       # (B, H) f32

    # relu -> hidden2 + BN
    h = jnp.maximum(h, 0.0).astype(jnp.bfloat16)
    h = jnp.dot(h, w2_ref[...], preferred_element_type=jnp.float32)
    h = _batchnorm_train(h, gb2_ref[...])                       # (B, H)

    # relu -> output + BN (lane-dense 128-wide; padded columns are exactly 0
    # pre-BN and stay 0 post-BN because gamma_pad=1, beta_pad=0)
    h = jnp.maximum(h, 0.0).astype(jnp.bfloat16)
    h = jnp.dot(h, w3_ref[...], preferred_element_type=jnp.float32)
    h = _batchnorm_train(h, gb3_ref[...])                       # (B, 128)

    # Mask padded logit columns, then stable log_softmax over dim=1.
    col = jax.lax.broadcasted_iota(jnp.int32, h.shape, 1)
    h = jnp.where(col < OUT_RAW, h, jnp.float32(-1e30))
    m = jnp.max(h, axis=1, keepdims=True)
    lse = jnp.log(jnp.sum(jnp.exp(h - m), axis=1, keepdims=True)) + m
    o_ref[...] = h - lse


def prepare_params(w1, g1, b1, w2, g2, b2, w3, g3, b3):
    """One-time weight preparation (do NOT re-run per forward step):
    - zero-pad w1 rows 784 -> 896,
    - zero-pad the output layer 10 -> 128 columns (gamma_pad=1, beta_pad=0),
    - cast weight matrices to bf16 so the kernel streams half the HBM bytes,
    - stack each layer's (gamma, beta) into a single (2, C) f32 array.
    Linear weights are already in (in, out) layout (transposed from PyTorch).
    """
    H = w1.shape[1]
    w1p = jnp.zeros((IN_PAD, H), jnp.float32).at[:IN_RAW, :].set(w1).astype(jnp.bfloat16)
    w2p = w2.astype(jnp.bfloat16)
    w3p = jnp.zeros((H, OUT_PAD), jnp.float32).at[:, :OUT_RAW].set(w3).astype(jnp.bfloat16)

    gb1 = jnp.concatenate([g1.reshape(1, H), b1.reshape(1, H)], axis=0).astype(jnp.float32)
    gb2 = jnp.concatenate([g2.reshape(1, H), b2.reshape(1, H)], axis=0).astype(jnp.float32)
    g3p = jnp.ones((1, OUT_PAD), jnp.float32).at[:, :OUT_RAW].set(g3.reshape(1, OUT_RAW))
    b3p = jnp.zeros((1, OUT_PAD), jnp.float32).at[:, :OUT_RAW].set(b3.reshape(1, OUT_RAW))
    gb3 = jnp.concatenate([g3p, b3p], axis=0)
    return (w1p, gb1, w2p, gb2, w3p, gb3)


@jax.jit
def net_forward(x_nchw, w1, gb1, w2, gb2, w3, gb3):
    B = x_nchw.shape[0]
    H = w1.shape[1]

    x_flat = x_nchw.reshape(B, -1)                                    # (B, 784)
    x_pad = jnp.pad(x_flat, ((0, 0), (0, IN_PAD - x_flat.shape[1])))  # (B, 896)

    flops = 2 * B * (IN_PAD * H + H * H + H * OUT_PAD)
    transcendentals = B * OUT_PAD + B + (2 * H + OUT_PAD)             # exp/log + rsqrt
    bytes_accessed = (x_pad.size * 4
                      + (w1.size + w2.size + w3.size) * 2             # bf16 weights
                      + (gb1.size + gb2.size + gb3.size) * 4
                      + B * OUT_PAD * 4)

    vmem_spec = pl.BlockSpec(memory_space=pltpu.MemorySpace.VMEM)
    out_full = pl.pallas_call(
        mlp_kernel,
        out_shape=jax.ShapeDtypeStruct((B, OUT_PAD), jnp.float32),
        in_specs=[vmem_spec] * 7,
        out_specs=vmem_spec,
        cost_estimate=pl.CostEstimate(flops=flops,
                                      transcendentals=transcendentals,
                                      bytes_accessed=bytes_accessed),
    )(x_pad, w1, gb1, w2, gb2, w3, gb3)
    return out_full[:, :OUT_RAW]


def reference_forward_f32(x_nchw, w1, g1, b1, w2, g2, b2, w3, g3, b3):
    """Pure-JAX f32 reference mirroring the PyTorch forward (training-mode BN)."""
    B = x_nchw.shape[0]
    x = x_nchw.reshape(B, -1).astype(jnp.float32)

    def bn(h, g, bta):
        mean = jnp.mean(h, axis=0, keepdims=True)
        var = jnp.mean((h - mean) ** 2, axis=0, keepdims=True)
        return (h - mean) / jnp.sqrt(var + BN_EPS) * g + bta

    h = bn(x @ w1, g1, b1)
    h = bn(jnp.maximum(h, 0.0) @ w2, g2, b2)
    h = bn(jnp.maximum(h, 0.0) @ w3, g3, b3)
    return jax.nn.log_softmax(h, axis=1)


def reference_forward_matched(x_nchw, w1p, gb1, w2p, gb2, w3p, gb3):
    """Pure-JAX reference mirroring the kernel's bf16-weight / f32-accumulate
    numerics (same padded params), for a tight tolerance check."""
    B = x_nchw.shape[0]
    x = jnp.pad(x_nchw.reshape(B, -1), ((0, 0), (0, IN_PAD - IN_RAW)))
    x = x.astype(jnp.bfloat16)

    def bn(h, gb):
        mean = jnp.mean(h, axis=0, keepdims=True)
        var = jnp.maximum(jnp.mean(h * h, axis=0, keepdims=True) - mean * mean, 0.0)
        return (h - mean) * jax.lax.rsqrt(var + BN_EPS) * gb[0:1] + gb[1:2]

    h = bn(jnp.dot(x, w1p, preferred_element_type=jnp.float32), gb1)
    h = bn(jnp.dot(jnp.maximum(h, 0.0).astype(jnp.bfloat16), w2p,
                   preferred_element_type=jnp.float32), gb2)
    h = bn(jnp.dot(jnp.maximum(h, 0.0).astype(jnp.bfloat16), w3p,
                   preferred_element_type=jnp.float32), gb3)
    return jax.nn.log_softmax(h[:, :OUT_RAW], axis=1)


if __name__ == "__main__":
    # batch=8 (sublane-friendly, >1 so training-mode BN stats are defined),
    # num_neurons=256 (module default), input images (8, 1, 28, 28).
    B, H = 8, 256

    key = jax.random.PRNGKey(0)
    keys = jax.random.split(key, 8)

    x = jax.random.normal(keys[0], (B, 1, 28, 28), dtype=jnp.float32)

    # Linear weights (PyTorch (out,in)) generated/stored transposed as (in,out).
    w1 = jax.random.normal(keys[1], (IN_RAW, H), dtype=jnp.float32) * 0.05
    w2 = jax.random.normal(keys[2], (H, H), dtype=jnp.float32) * 0.05
    w3 = jax.random.normal(keys[3], (H, OUT_RAW), dtype=jnp.float32) * 0.05

    # BatchNorm affine params (defaults are gamma=1, beta=0; use non-trivial
    # deterministic values to exercise the affine path).
    g1 = 1.0 + 0.1 * jax.random.normal(keys[4], (1, H), dtype=jnp.float32)
    b1 = 0.1 * jax.random.normal(keys[5], (1, H), dtype=jnp.float32)
    g2 = 1.0 + 0.1 * jax.random.normal(keys[6], (1, H), dtype=jnp.float32)
    b2 = 0.1 * jax.random.normal(keys[7], (1, H), dtype=jnp.float32)
    g3 = jnp.linspace(0.9, 1.1, OUT_RAW, dtype=jnp.float32).reshape(1, OUT_RAW)
    b3 = jnp.linspace(-0.05, 0.05, OUT_RAW, dtype=jnp.float32).reshape(1, OUT_RAW)

    # One-time weight prep (bf16 cast + padding + gamma/beta stacking) so the
    # per-step call streams only bf16 weights + 3 small param slabs from HBM.
    params = prepare_params(w1, g1, b1, w2, g2, b2, w3, g3, b3)

    # TODO(synk): dni BackwardInterface / one_hot context path (use_dni=True)
    # is a training-time synthetic-gradient hook, not part of the inference
    # forward compute; running_mean/running_var buffer updates are likewise
    # training-side state and not modeled here.

    out = net_forward(x, *params)
    out = jax.block_until_ready(out)
    assert out.shape == (B, OUT_RAW)

    # Tight check against a reference that mirrors the kernel's bf16 numerics.
    ref_m = reference_forward_matched(x, *params)
    assert jnp.allclose(out, ref_m, atol=2e-3, rtol=2e-3), "mismatch vs matched reference"

    # Loose check against the full-f32 PyTorch-semantics reference
    # (difference is only bf16 weight/activation quantization).
    ref_f32 = reference_forward_f32(x, w1, g1, b1, w2, g2, b2, w3, g3, b3)
    assert jnp.allclose(out, ref_f32, atol=1e-1), "mismatch vs f32 reference"

    # log_softmax rows should sum to ~1 in prob space
    assert jnp.allclose(jnp.sum(jnp.exp(out), axis=1), 1.0, atol=1e-4)

    print("KERNEL_OK")
</pallas_src>

<mosaic_0001>
module attributes {stable_mosaic.version = 11 : i64} {
  func.func @mlp_kernel(%arg0: memref<8x896xf32, #tpu.memory_space<vmem>>, %arg1: memref<896x256xbf16, #tpu.memory_space<vmem>>, %arg2: memref<2x256xf32, #tpu.memory_space<vmem>>, %arg3: memref<256x256xbf16, #tpu.memory_space<vmem>>, %arg4: memref<2x256xf32, #tpu.memory_space<vmem>>, %arg5: memref<256x128xbf16, #tpu.memory_space<vmem>>, %arg6: memref<2x128xf32, #tpu.memory_space<vmem>>, %arg7: memref<8x128xf32, #tpu.memory_space<vmem>>) attributes {dimension_semantics = [], scalar_prefetch = 0 : i64, scratch_operands = 0 : i64, tpu.core_type = #tpu.core_type<tc>} {
    %c0 = arith.constant 0 : index
    %c0_0 = arith.constant 0 : index
    %0 = vector.load %arg0[%c0, %c0_0] : memref<8x896xf32, #tpu.memory_space<vmem>>, vector<8x896xf32>
    %1 = arith.truncf %0 : vector<8x896xf32> to vector<8x896xbf16>
    %c0_1 = arith.constant 0 : index
    %c0_2 = arith.constant 0 : index
    %2 = vector.load %arg1[%c0_1, %c0_2] : memref<896x256xbf16, #tpu.memory_space<vmem>>, vector<896x256xbf16>
    %cst = arith.constant dense<0.000000e+00> : vector<8x256xf32>
    %3 = tpu.matmul %1, %2, %cst {dimension_numbers = #tpu.dot_dimension_numbers<[1], [0], [0], [1], [0, 0, 1, 1], [], []>} : vector<8x896xbf16>, vector<896x256xbf16>, vector<8x256xf32> -> vector<8x256xf32>
    %c0_3 = arith.constant 0 : index
    %c0_4 = arith.constant 0 : index
    %4 = vector.load %arg2[%c0_3, %c0_4] : memref<2x256xf32, #tpu.memory_space<vmem>>, vector<2x256xf32>
    %5 = vector.extract_strided_slice %4 {offsets = [0, 0], sizes = [1, 256], strides = [1, 1]} : vector<2x256xf32> to vector<1x256xf32>
    %6 = vector.extract_strided_slice %4 {offsets = [1, 0], sizes = [1, 256], strides = [1, 1]} : vector<2x256xf32> to vector<1x256xf32>
    %cst_5 = arith.constant dense<0.000000e+00> : vector<256xf32>
    %7 = vector.multi_reduction <add>, %3, %cst_5 [0] : vector<8x256xf32> to vector<256xf32>
    %8 = vector.shape_cast %7 : vector<256xf32> to vector<1x256xf32>
    %cst_6 = arith.constant 8.000000e+00 : f32
    %9 = vector.broadcast %cst_6 : f32 to vector<1x256xf32>
    %10 = arith.divf %8, %9 : vector<1x256xf32>
    %11 = arith.mulf %3, %3 : vector<8x256xf32>
    %cst_7 = arith.constant dense<0.000000e+00> : vector<256xf32>
    %12 = vector.multi_reduction <add>, %11, %cst_7 [0] : vector<8x256xf32> to vector<256xf32>
    %13 = vector.shape_cast %12 : vector<256xf32> to vector<1x256xf32>
    %cst_8 = arith.constant 8.000000e+00 : f32
    %14 = vector.broadcast %cst_8 : f32 to vector<1x256xf32>
    %15 = arith.divf %13, %14 : vector<1x256xf32>
    %16 = arith.mulf %10, %10 : vector<1x256xf32>
    %17 = arith.subf %15, %16 : vector<1x256xf32>
    %cst_9 = arith.constant 0.000000e+00 : f32
    %18 = vector.broadcast %cst_9 : f32 to vector<1x256xf32>
    %19 = arith.maximumf %17, %18 : vector<1x256xf32>
    %20 = vector.broadcast %10 : vector<1x256xf32> to vector<8x256xf32>
    %21 = arith.subf %3, %20 : vector<8x256xf32>
    %cst_10 = arith.constant 9.99999974E-6 : f32
    %22 = vector.broadcast %cst_10 : f32 to vector<1x256xf32>
    %23 = arith.addf %19, %22 : vector<1x256xf32>
    %24 = math.rsqrt %23 : vector<1x256xf32>
    %25 = vector.broadcast %24 : vector<1x256xf32> to vector<8x256xf32>
    %26 = arith.mulf %21, %25 : vector<8x256xf32>
    %27 = vector.broadcast %5 : vector<1x256xf32> to vector<8x256xf32>
    %28 = arith.mulf %26, %27 : vector<8x256xf32>
    %29 = vector.broadcast %6 : vector<1x256xf32> to vector<8x256xf32>
    %30 = arith.addf %28, %29 : vector<8x256xf32>
    %cst_11 = arith.constant 0.000000e+00 : f32
    %31 = vector.broadcast %cst_11 : f32 to vector<8x256xf32>
    %32 = arith.maximumf %30, %31 : vector<8x256xf32>
    %33 = arith.truncf %32 : vector<8x256xf32> to vector<8x256xbf16>
    %c0_12 = arith.constant 0 : index
    %c0_13 = arith.constant 0 : index
    %34 = vector.load %arg3[%c0_12, %c0_13] : memref<256x256xbf16, #tpu.memory_space<vmem>>, vector<256x256xbf16>
    %cst_14 = arith.constant dense<0.000000e+00> : vector<8x256xf32>
    %35 = tpu.matmul %33, %34, %cst_14 {dimension_numbers = #tpu.dot_dimension_numbers<[1], [0], [0], [1], [0, 0, 1, 1], [], []>} : vector<8x256xbf16>, vector<256x256xbf16>, vector<8x256xf32> -> vector<8x256xf32>
    %c0_15 = arith.constant 0 : index
    %c0_16 = arith.constant 0 : index
    %36 = vector.load %arg4[%c0_15, %c0_16] : memref<2x256xf32, #tpu.memory_space<vmem>>, vector<2x256xf32>
    %37 = vector.extract_strided_slice %36 {offsets = [0, 0], sizes = [1, 256], strides = [1, 1]} : vector<2x256xf32> to vector<1x256xf32>
    %38 = vector.extract_strided_slice %36 {offsets = [1, 0], sizes = [1, 256], strides = [1, 1]} : vector<2x256xf32> to vector<1x256xf32>
    %cst_17 = arith.constant dense<0.000000e+00> : vector<256xf32>
    %39 = vector.multi_reduction <add>, %35, %cst_17 [0] : vector<8x256xf32> to vector<256xf32>
    %40 = vector.shape_cast %39 : vector<256xf32> to vector<1x256xf32>
    %cst_18 = arith.constant 8.000000e+00 : f32
    %41 = vector.broadcast %cst_18 : f32 to vector<1x256xf32>
    %42 = arith.divf %40, %41 : vector<1x256xf32>
    %43 = arith.mulf %35, %35 : vector<8x256xf32>
    %cst_19 = arith.constant dense<0.000000e+00> : vector<256xf32>
    %44 = vector.multi_reduction <add>, %43, %cst_19 [0] : vector<8x256xf32> to vector<256xf32>
    %45 = vector.shape_cast %44 : vector<256xf32> to vector<1x256xf32>
    %cst_20 = arith.constant 8.000000e+00 : f32
    %46 = vector.broadcast %cst_20 : f32 to vector<1x256xf32>
    %47 = arith.divf %45, %46 : vector<1x256xf32>
    %48 = arith.mulf %42, %42 : vector<1x256xf32>
    %49 = arith.subf %47, %48 : vector<1x256xf32>
    %cst_21 = arith.constant 0.000000e+00 : f32
    %50 = vector.broadcast %cst_21 : f32 to vector<1x256xf32>
    %51 = arith.maximumf %49, %50 : vector<1x256xf32>
    %52 = vector.broadcast %42 : vector<1x256xf32> to vector<8x256xf32>
    %53 = arith.subf %35, %52 : vector<8x256xf32>
    %cst_22 = arith.constant 9.99999974E-6 : f32
    %54 = vector.broadcast %cst_22 : f32 to vector<1x256xf32>
    %55 = arith.addf %51, %54 : vector<1x256xf32>
    %56 = math.rsqrt %55 : vector<1x256xf32>
    %57 = vector.broadcast %56 : vector<1x256xf32> to vector<8x256xf32>
    %58 = arith.mulf %53, %57 : vector<8x256xf32>
    %59 = vector.broadcast %37 : vector<1x256xf32> to vector<8x256xf32>
    %60 = arith.mulf %58, %59 : vector<8x256xf32>
    %61 = vector.broadcast %38 : vector<1x256xf32> to vector<8x256xf32>
    %62 = arith.addf %60, %61 : vector<8x256xf32>
    %cst_23 = arith.constant 0.000000e+00 : f32
    %63 = vector.broadcast %cst_23 : f32 to vector<8x256xf32>
    %64 = arith.maximumf %62, %63 : vector<8x256xf32>
    %65 = arith.truncf %64 : vector<8x256xf32> to vector<8x256xbf16>
    %c0_24 = arith.constant 0 : index
    %c0_25 = arith.constant 0 : index
    %66 = vector.load %arg5[%c0_24, %c0_25] : memref<256x128xbf16, #tpu.memory_space<vmem>>, vector<256x128xbf16>
    %cst_26 = arith.constant dense<0.000000e+00> : vector<8x128xf32>
    %67 = tpu.matmul %65, %66, %cst_26 {dimension_numbers = #tpu.dot_dimension_numbers<[1], [0], [0], [1], [0, 0, 1, 1], [], []>} : vector<8x256xbf16>, vector<256x128xbf16>, vector<8x128xf32> -> vector<8x128xf32>
    %c0_27 = arith.constant 0 : index
    %c0_28 = arith.constant 0 : index
    %68 = vector.load %arg6[%c0_27, %c0_28] : memref<2x128xf32, #tpu.memory_space<vmem>>, vector<2x128xf32>
    %69 = vector.extract_strided_slice %68 {offsets = [0, 0], sizes = [1, 128], strides = [1, 1]} : vector<2x128xf32> to vector<1x128xf32>
    %70 = vector.extract_strided_slice %68 {offsets = [1, 0], sizes = [1, 128], strides = [1, 1]} : vector<2x128xf32> to vector<1x128xf32>
    %cst_29 = arith.constant dense<0.000000e+00> : vector<128xf32>
    %71 = vector.multi_reduction <add>, %67, %cst_29 [0] : vector<8x128xf32> to vector<128xf32>
    %72 = vector.shape_cast %71 : vector<128xf32> to vector<1x128xf32>
    %cst_30 = arith.constant 8.000000e+00 : f32
    %73 = vector.broadcast %cst_30 : f32 to vector<1x128xf32>
    %74 = arith.divf %72, %73 : vector<1x128xf32>
    %75 = arith.mulf %67, %67 : vector<8x128xf32>
    %cst_31 = arith.constant dense<0.000000e+00> : vector<128xf32>
    %76 = vector.multi_reduction <add>, %75, %cst_31 [0] : vector<8x128xf32> to vector<128xf32>
    %77 = vector.shape_cast %76 : vector<128xf32> to vector<1x128xf32>
    %cst_32 = arith.constant 8.000000e+00 : f32
    %78 = vector.broadcast %cst_32 : f32 to vector<1x128xf32>
    %79 = arith.divf %77, %78 : vector<1x128xf32>
    %80 = arith.mulf %74, %74 : vector<1x128xf32>
    %81 = arith.subf %79, %80 : vector<1x128xf32>
    %cst_33 = arith.constant 0.000000e+00 : f32
    %82 = vector.broadcast %cst_33 : f32 to vector<1x128xf32>
    %83 = arith.maximumf %81, %82 : vector<1x128xf32>
    %84 = vector.broadcast %74 : vector<1x128xf32> to vector<8x128xf32>
    %85 = arith.subf %67, %84 : vector<8x128xf32>
    %cst_34 = arith.constant 9.99999974E-6 : f32
    %86 = vector.broadcast %cst_34 : f32 to vector<1x128xf32>
    %87 = arith.addf %83, %86 : vector<1x128xf32>
    %88 = math.rsqrt %87 : vector<1x128xf32>
    %89 = vector.broadcast %88 : vector<1x128xf32> to vector<8x128xf32>
    %90 = arith.mulf %85, %89 : vector<8x128xf32>
    %91 = vector.broadcast %69 : vector<1x128xf32> to vector<8x128xf32>
    %92 = arith.mulf %90, %91 : vector<8x128xf32>
    %93 = vector.broadcast %70 : vector<1x128xf32> to vector<8x128xf32>
    %94 = arith.addf %92, %93 : vector<8x128xf32>
    %95 = tpu.iota {dimensions = array<i32: 1>} : vector<8x128xi32>
    %c10_i32 = arith.constant 10 : i32
    %96 = vector.broadcast %c10_i32 : i32 to vector<8x128xi32>
    %97 = arith.cmpi slt, %95, %96 : vector<8x128xi32>
    %cst_35 = arith.constant -1.000000e+30 : f32
    %98 = vector.broadcast %cst_35 : f32 to vector<8x128xf32>
    %99 = arith.select %97, %94, %98 : vector<8x128xi1>, vector<8x128xf32>
    %cst_36 = arith.constant dense<0xFF800000> : vector<8xf32>
    %100 = vector.multi_reduction <maximumf>, %99, %cst_36 [1] : vector<8x128xf32> to vector<8xf32>
    %101 = vector.shape_cast %100 : vector<8xf32> to vector<8x1xf32>
    %102 = vector.broadcast %101 : vector<8x1xf32> to vector<8x128xf32>
    %103 = arith.subf %99, %102 : vector<8x128xf32>
    %104 = math.exp %103 : vector<8x128xf32>
    %cst_37 = arith.constant dense<0.000000e+00> : vector<8xf32>
    %105 = vector.multi_reduction <add>, %104, %cst_37 [1] : vector<8x128xf32> to vector<8xf32>
    %106 = vector.shape_cast %105 : vector<8xf32> to vector<8x1xf32>
    %107 = math.log %106 : vector<8x1xf32>
    %108 = arith.addf %107, %101 : vector<8x1xf32>
    %109 = vector.broadcast %108 : vector<8x1xf32> to vector<8x128xf32>
    %110 = arith.subf %99, %109 : vector<8x128xf32>
    %c0_38 = arith.constant 0 : index
    %c0_39 = arith.constant 0 : index
    %111 = vector.load %arg7[%c0_38, %c0_39] : memref<8x128xf32, #tpu.memory_space<vmem>>, vector<8x128xf32>
    tpu.vector_store %arg7[%c0_38, %c0_39], %110 {strides = array<i32>} : memref<8x128xf32, #tpu.memory_space<vmem>>, vector<8x128xf32>,
    return
  }
}

</mosaic_0001>

<llo_original>
// kernel: net_forward.1
$region0: #{net_forward.1}
  #allocation0 [shape = 'u32[]', space=smem, size = 0x4, offset = 0x4, fixed_abs, tag = 'smem constant byte address 0x4 - core index']
  #allocation1 [shape = 'u32[144,128]{1,0:T(1,128)}', space=vmem, size = 0x12000, scoped, tag = 'internal scratch']
  %s0 = inlined_call_operand.vmem [shape: f32[8,896], index: 0, kind: input, shape index: {}]
  %s1 = inlined_call_operand.vmem [shape: bf16[896,256], index: 1, kind: input, shape index: {}]
  %s2 = inlined_call_operand.vmem [shape: f32[2,256], index: 2, kind: input, shape index: {}]
  %s3 = inlined_call_operand.hbm [shape: bf16[256,256], index: 3, kind: input, shape index: {}]
  %s4 = inlined_call_operand.vmem [shape: f32[2,256], index: 4, kind: input, shape index: {}]
  %s5 = inlined_call_operand.hbm [shape: bf16[256,128], index: 5, kind: input, shape index: {}]
  %s6 = inlined_call_operand.vmem [shape: f32[2,128], index: 6, kind: input, shape index: {}]
  %s7 = inlined_call_operand.hbm [shape: f32[8,128], index: 7, kind: output, shape index: {}]
  %s8 = sld [smem:[#allocation0]]
  $region46: #{net_forward.1} parent=0
    _
  %s10 = ssub.s32 1, %s8
  %s11 = scalar_select 0, %s10, %s8
  $region1: #{net_forward.1} parent=0
    #allocation2 [shape = 'u8[131072]{0}', space=vmem, size = 0x20000, scoped, tag = 'input window, operand 3, single buffered']
    #allocation3 [shape = 's32[1]{0}', space=sflag, size = 0x4, scoped, tag = 'scoped memory for net_forward.1']
    #allocation4 [shape = 's32[1]{0}', space=sflag, size = 0x4, scoped, tag = 'scoped memory for net_forward.1']
    #allocation5 [shape = 'u8[65536]{0}', space=vmem, size = 0x10000, scoped, tag = 'input window, operand 5, single buffered']
    #allocation6 [shape = 's32[1]{0}', space=sflag, size = 0x4, scoped, tag = 'scoped memory for net_forward.1']
    #allocation7 [shape = 'u8[4096]{0}', space=vmem, size = 0x1000, scoped, tag = 'output window, operand 0, single buffered']
    %12 = vsyncpa [#allocation3], 0
    %13 = vsyncpa [#allocation6], 0
    %14 = vsyncpa [#allocation4], 0
    // Predicated region
    $region2: #{net_forward.1} parent=1 // pred_check
      _
    $region3: #{net_forward.1} parent=1 // pred_check_branch
      %16 = sbr.rel (0) target = $region5
    $region4: #{net_forward.1} parent=1 // pred_region
      _
    $region5: #{net_forward.1} parent=1 // pred_fallthru
      _
    // Predicated region
    $region6: #{net_forward.1} parent=1 // pred_check
      _
    $region7: #{net_forward.1} parent=1 // pred_check_branch
      %18 = sbr.rel (0) target = $region9
    $region8: #{net_forward.1} parent=1 // pred_region
      _
    $region9: #{net_forward.1} parent=1 // pred_fallthru
      _
    // Predicated region
    $region10: #{net_forward.1} parent=1 // pred_check
      _
    $region11: #{net_forward.1} parent=1 // pred_check_branch
      %20 = sbr.rel (0) target = $region13
    $region12: #{net_forward.1} parent=1 // pred_region
      _
    $region13: #{net_forward.1} parent=1 // pred_fallthru
      _
    // Predicated region
    $region14: #{net_forward.1} parent=1 // pred_check
      _
    $region15: #{net_forward.1} parent=1 // pred_check_branch
      %22 = sbr.rel (0) target = $region17
    $region16: #{net_forward.1} parent=1 // pred_region
      %s24 = ssub.s32 4096, 4096
      %25 = vsyncadd [#allocation3], %s24
      %s26 = sshll.u32 [#allocation2], 4
      %s27 = int_to_ptr.vmem [resolvable:$true] %s26
      %32 = dma.hbm_to_vmem [thread:$0]  %s3, 4096, %s27, [#allocation3], 128, 128, 8
    $region17: #{net_forward.1} parent=1 // pred_fallthru
      _
    // Predicated region
    $region18: #{net_forward.1} parent=1 // pred_check
      _
    $region19: #{net_forward.1} parent=1 // pred_check_branch
      %34 = sbr.rel (0) target = $region21
    $region20: #{net_forward.1} parent=1 // pred_region
      _
    $region21: #{net_forward.1} parent=1 // pred_fallthru
      _
    // Predicated region
    $region22: #{net_forward.1} parent=1 // pred_check
      _
    $region23: #{net_forward.1} parent=1 // pred_check_branch
      %36 = sbr.rel (0) target = $region25
    $region24: #{net_forward.1} parent=1 // pred_region
      %s38 = ssub.s32 2048, 2048
      %39 = vsyncadd [#allocation6], %s38
      %s40 = sshll.u32 [#allocation5], 4
      %s41 = int_to_ptr.vmem [resolvable:$true] %s40
      %46 = dma.hbm_to_vmem [thread:$0]  %s5, 2048, %s41, [#allocation6], 64, 64, 4
    $region25: #{net_forward.1} parent=1 // pred_fallthru
      _
    // Predicated region
    $region26: #{net_forward.1} parent=1 // pred_check
      _
    $region27: #{net_forward.1} parent=1 // pred_check_branch
      %48 = sbr.rel (0) target = $region29
    $region28: #{net_forward.1} parent=1 // pred_region
      _
    $region29: #{net_forward.1} parent=1 // pred_fallthru
      _
    // Predicated region
    $region30: #{net_forward.1} parent=1 // pred_check
      _
    $region31: #{net_forward.1} parent=1 // pred_check_branch
      %50 = sbr.rel (0) target = $region33
    $region32: #{net_forward.1} parent=1 // pred_region
      %51 = dma.done [#allocation3], 4096
    $region33: #{net_forward.1} parent=1 // pred_fallthru
      _
    // Predicated region
    $region34: #{net_forward.1} parent=1 // pred_check
      _
    $region35: #{net_forward.1} parent=1 // pred_check_branch
      %53 = sbr.rel (0) target = $region37
    $region36: #{net_forward.1} parent=1 // pred_region
      %54 = dma.done [#allocation6], 2048
    $region37: #{net_forward.1} parent=1 // pred_fallthru
      _
    %v56 = vld [vmem:[%s0] sm:$0xff]
    %v57 = vld [vmem:[%s0 + $0x8] sm:$0xff]
    %v58 = vld [vmem:[%s0 + $0x10] sm:$0xff]
    %v59 = vld [vmem:[%s0 + $0x18] sm:$0xff]
    %v60 = vld [vmem:[%s0 + $0x20] sm:$0xff]
    %v61 = vld [vmem:[%s0 + $0x28] sm:$0xff]
    %v62 = vld [vmem:[%s0 + $0x30] sm:$0xff]
    %v63 = vpack.c.bf16 %v56, %v56
    %v64 = vpack.c.bf16 %v57, %v57
    %v65 = vpack.c.bf16 %v58, %v58
    %v66 = vpack.c.bf16 %v59, %v59
    %v67 = vpack.c.bf16 %v60, %v60
    %v68 = vpack.c.bf16 %v61, %v61
    %v69 = vpack.c.bf16 %v62, %v62
    %v70 = vld [vmem:[%s1] sm:$0xff]
    %v71 = vld [vmem:[%s1 + $0x8] sm:$0xff]
    %v72 = vld [vmem:[%s1 + $0x10] sm:$0xff]
    %v73 = vld [vmem:[%s1 + $0x18] sm:$0xff]
    %v74 = vld [vmem:[%s1 + $0x20] sm:$0xff]
    %v75 = vld [vmem:[%s1 + $0x28] sm:$0xff]
    %v76 = vld [vmem:[%s1 + $0x30] sm:$0xff]
    %v77 = vld [vmem:[%s1 + $0x38] sm:$0xff]
    %v78 = vld [vmem:[%s1 + $0x40] sm:$0xff]
    %v79 = vld [vmem:[%s1 + $0x48] sm:$0xff]
    %v80 = vld [vmem:[%s1 + $0x50] sm:$0xff]
    %v81 = vld [vmem:[%s1 + $0x58] sm:$0xff]
    %v82 = vld [vmem:[%s1 + $0x60] sm:$0xff]
    %v83 = vld [vmem:[%s1 + $0x68] sm:$0xff]
    %v84 = vld [vmem:[%s1 + $0x70] sm:$0xff]
    %v85 = vld [vmem:[%s1 + $0x78] sm:$0xff]
    %v86 = vld [vmem:[%s1 + $0x80] sm:$0xff]
    %v87 = vld [vmem:[%s1 + $0x88] sm:$0xff]
    %v88 = vld [vmem:[%s1 + $0x90] sm:$0xff]
    %v89 = vld [vmem:[%s1 + $0x98] sm:$0xff]
    %v90 = vld [vmem:[%s1 + $0xa0] sm:$0xff]
    %v91 = vld [vmem:[%s1 + $0xa8] sm:$0xff]
    %v92 = vld [vmem:[%s1 + $0xb0] sm:$0xff]
    %v93 = vld [vmem:[%s1 + $0xb8] sm:$0xff]
    %v94 = vld [vmem:[%s1 + $0xc0] sm:$0xff]
    %v95 = vld [vmem:[%s1 + $0xc8] sm:$0xff]
    %v96 = vld [vmem:[%s1 + $0xd0] sm:$0xff]
    %v97 = vld [vmem:[%s1 + $0xd8] sm:$0xff]
    %v98 = vld [vmem:[%s1 + $0xe0] sm:$0xff]
    %v99 = vld [vmem:[%s1 + $0xe8] sm:$0xff]
    %v100 = vld [vmem:[%s1 + $0xf0] sm:$0xff]
    %v101 = vld [vmem:[%s1 + $0xf8] sm:$0xff]
    %v102 = vld [vmem:[%s1 + $0x100] sm:$0xff]
    %v103 = vld [vmem:[%s1 + $0x108] sm:$0xff]
    %v104 = vld [vmem:[%s1 + $0x110] sm:$0xff]
    %v105 = vld [vmem:[%s1 + $0x118] sm:$0xff]
    %v106 = vld [vmem:[%s1 + $0x120] sm:$0xff]
    %v107 = vld [vmem:[%s1 + $0x128] sm:$0xff]
    %v108 = vld [vmem:[%s1 + $0x130] sm:$0xff]
    %v109 = vld [vmem:[%s1 + $0x138] sm:$0xff]
    %v110 = vld [vmem:[%s1 + $0x140] sm:$0xff]
    %v111 = vld [vmem:[%s1 + $0x148] sm:$0xff]
    %v112 = vld [vmem:[%s1 + $0x150] sm:$0xff]
    %v113 = vld [vmem:[%s1 + $0x158] sm:$0xff]
    %v114 = vld [vmem:[%s1 + $0x160] sm:$0xff]
    %v115 = vld [vmem:[%s1 + $0x168] sm:$0xff]
    %v116 = vld [vmem:[%s1 + $0x170] sm:$0xff]
    %v117 = vld [vmem:[%s1 + $0x178] sm:$0xff]
    %v118 = vld [vmem:[%s1 + $0x180] sm:$0xff]
    %v119 = vld [vmem:[%s1 + $0x188] sm:$0xff]
    %v120 = vld [vmem:[%s1 + $0x190] sm:$0xff]
    %v121 = vld [vmem:[%s1 + $0x198] sm:$0xff]
    %v122 = vld [vmem:[%s1 + $0x1a0] sm:$0xff]
    %v123 = vld [vmem:[%s1 + $0x1a8] sm:$0xff]
    %v124 = vld [vmem:[%s1 + $0x1b0] sm:$0xff]
    %v125 = vld [vmem:[%s1 + $0x1b8] sm:$0xff]
    %v126 = vld [vmem:[%s1 + $0x1c0] sm:$0xff]
    %v127 = vld [vmem:[%s1 + $0x1c8] sm:$0xff]
    %v128 = vld [vmem:[%s1 + $0x1d0] sm:$0xff]
    %v129 = vld [vmem:[%s1 + $0x1d8] sm:$0xff]
    %v130 = vld [vmem:[%s1 + $0x1e0] sm:$0xff]
    %v131 = vld [vmem:[%s1 + $0x1e8] sm:$0xff]
    %v132 = vld [vmem:[%s1 + $0x1f0] sm:$0xff]
    %v133 = vld [vmem:[%s1 + $0x1f8] sm:$0xff]
    %v134 = vld [vmem:[%s1 + $0x200] sm:$0xff]
    %v135 = vld [vmem:[%s1 + $0x208] sm:$0xff]
    %v136 = vld [vmem:[%s1 + $0x210] sm:$0xff]
    %v137 = vld [vmem:[%s1 + $0x218] sm:$0xff]
    %v138 = vld [vmem:[%s1 + $0x220] sm:$0xff]
    %v139 = vld [vmem:[%s1 + $0x228] sm:$0xff]
    %v140 = vld [vmem:[%s1 + $0x230] sm:$0xff]
    %v141 = vld [vmem:[%s1 + $0x238] sm:$0xff]
    %v142 = vld [vmem:[%s1 + $0x240] sm:$0xff]
    %v143 = vld [vmem:[%s1 + $0x248] sm:$0xff]
    %v144 = vld [vmem:[%s1 + $0x250] sm:$0xff]
    %v145 = vld [vmem:[%s1 + $0x258] sm:$0xff]
    %v146 = vld [vmem:[%s1 + $0x260] sm:$0xff]
    %v147 = vld [vmem:[%s1 + $0x268] sm:$0xff]
    %v148 = vld [vmem:[%s1 + $0x270] sm:$0xff]
    %v149 = vld [vmem:[%s1 + $0x278] sm:$0xff]
    %v150 = vld [vmem:[%s1 + $0x280] sm:$0xff]
    %v151 = vld [vmem:[%s1 + $0x288] sm:$0xff]
    %v152 = vld [vmem:[%s1 + $0x290] sm:$0xff]
    %v153 = vld [vmem:[%s1 + $0x298] sm:$0xff]
    %v154 = vld [vmem:[%s1 + $0x2a0] sm:$0xff]
    %v155 = vld [vmem:[%s1 + $0x2a8] sm:$0xff]
    %v156 = vld [vmem:[%s1 + $0x2b0] sm:$0xff]
    %v157 = vld [vmem:[%s1 + $0x2b8] sm:$0xff]
    %v158 = vld [vmem:[%s1 + $0x2c0] sm:$0xff]
    %v159 = vld [vmem:[%s1 + $0x2c8] sm:$0xff]
    %v160 = vld [vmem:[%s1 + $0x2d0] sm:$0xff]
    %v161 = vld [vmem:[%s1 + $0x2d8] sm:$0xff]
    %v162 = vld [vmem:[%s1 + $0x2e0] sm:$0xff]
    %v163 = vld [vmem:[%s1 + $0x2e8] sm:$0xff]
    %v164 = vld [vmem:[%s1 + $0x2f0] sm:$0xff]
    %v165 = vld [vmem:[%s1 + $0x2f8] sm:$0xff]
    %v166 = vld [vmem:[%s1 + $0x300] sm:$0xff]
    %v167 = vld [vmem:[%s1 + $0x308] sm:$0xff]
    %v168 = vld [vmem:[%s1 + $0x310] sm:$0xff]
    %v169 = vld [vmem:[%s1 + $0x318] sm:$0xff]
    %v170 = vld [vmem:[%s1 + $0x320] sm:$0xff]
    %v171 = vld [vmem:[%s1 + $0x328] sm:$0xff]
    %v172 = vld [vmem:[%s1 + $0x330] sm:$0xff]
    %v173 = vld [vmem:[%s1 + $0x338] sm:$0xff]
    %v174 = vld [vmem:[%s1 + $0x340] sm:$0xff]
    %v175 = vld [vmem:[%s1 + $0x348] sm:$0xff]
    %v176 = vld [vmem:[%s1 + $0x350] sm:$0xff]
    %v177 = vld [vmem:[%s1 + $0x358] sm:$0xff]
    %v178 = vld [vmem:[%s1 + $0x360] sm:$0xff]
    %v179 = vld [vmem:[%s1 + $0x368] sm:$0xff]
    %v180 = vld [vmem:[%s1 + $0x370] sm:$0xff]
    %v181 = vld [vmem:[%s1 + $0x378] sm:$0xff]
    %v294 = vunpack.c.l.b16 %v70
    %v295 = vunpack.c.h.b16 %v70
    %v296 = vunpack.c.l.b16 %v71
    %v297 = vunpack.c.h.b16 %v71
    %v298 = vunpack.c.l.b16 %v72
    %v299 = vunpack.c.h.b16 %v72
    %v300 = vunpack.c.l.b16 %v73
    %v301 = vunpack.c.h.b16 %v73
    %v302 = vunpack.c.l.b16 %v74
    %v303 = vunpack.c.h.b16 %v74
    %v304 = vunpack.c.l.b16 %v75
    %v305 = vunpack.c.h.b16 %v75
    %v306 = vunpack.c.l.b16 %v76
    %v307 = vunpack.c.h.b16 %v76
    %v308 = vunpack.c.l.b16 %v77
    %v309 = vunpack.c.h.b16 %v77
    %v310 = vunpack.c.l.b16 %v78
    %v311 = vunpack.c.h.b16 %v78
    %v312 = vunpack.c.l.b16 %v79
    %v313 = vunpack.c.h.b16 %v79
    %v314 = vunpack.c.l.b16 %v80
    %v315 = vunpack.c.h.b16 %v80
    %v316 = vunpack.c.l.b16 %v81
    %v317 = vunpack.c.h.b16 %v81
    %v318 = vunpack.c.l.b16 %v82
    %v319 = vunpack.c.h.b16 %v82
    %v320 = vunpack.c.l.b16 %v83
    %v321 = vunpack.c.h.b16 %v83
    %v322 = vunpack.c.l.b16 %v84
    %v323 = vunpack.c.h.b16 %v84
    %v324 = vunpack.c.l.b16 %v85
    %v325 = vunpack.c.h.b16 %v85
    %v326 = vunpack.c.l.b16 %v86
    %v327 = vunpack.c.h.b16 %v86
    %v328 = vunpack.c.l.b16 %v87
    %v329 = vunpack.c.h.b16 %v87
    %v330 = vunpack.c.l.b16 %v88
    %v331 = vunpack.c.h.b16 %v88
    %v332 = vunpack.c.l.b16 %v89
    %v333 = vunpack.c.h.b16 %v89
    %v334 = vunpack.c.l.b16 %v90
    %v335 = vunpack.c.h.b16 %v90
    %v336 = vunpack.c.l.b16 %v91
    %v337 = vunpack.c.h.b16 %v91
    %v338 = vunpack.c.l.b16 %v92
    %v339 = vunpack.c.h.b16 %v92
    %v340 = vunpack.c.l.b16 %v93
    %v341 = vunpack.c.h.b16 %v93
    %v342 = vunpack.c.l.b16 %v94
    %v343 = vunpack.c.h.b16 %v94
    %v344 = vunpack.c.l.b16 %v95
    %v345 = vunpack.c.h.b16 %v95
    %v346 = vunpack.c.l.b16 %v96
    %v347 = vunpack.c.h.b16 %v96
    %v348 = vunpack.c.l.b16 %v97
    %v349 = vunpack.c.h.b16 %v97
    %v350 = vunpack.c.l.b16 %v98
    %v351 = vunpack.c.h.b16 %v98
    %v352 = vunpack.c.l.b16 %v99
    %v353 = vunpack.c.h.b16 %v99
    %v354 = vunpack.c.l.b16 %v100
    %v355 = vunpack.c.h.b16 %v100
    %v356 = vunpack.c.l.b16 %v101
    %v357 = vunpack.c.h.b16 %v101
    %v358 = vunpack.c.l.b16 %v102
    %v359 = vunpack.c.h.b16 %v102
    %v360 = vunpack.c.l.b16 %v103
    %v361 = vunpack.c.h.b16 %v103
    %v362 = vunpack.c.l.b16 %v104
    %v363 = vunpack.c.h.b16 %v104
    %v364 = vunpack.c.l.b16 %v105
    %v365 = vunpack.c.h.b16 %v105
    %v366 = vunpack.c.l.b16 %v106
    %v367 = vunpack.c.h.b16 %v106
    %v368 = vunpack.c.l.b16 %v107
    %v369 = vunpack.c.h.b16 %v107
    %v370 = vunpack.c.l.b16 %v108
    %v371 = vunpack.c.h.b16 %v108
    %v372 = vunpack.c.l.b16 %v109
    %v373 = vunpack.c.h.b16 %v109
    %v374 = vunpack.c.l.b16 %v110
    %v375 = vunpack.c.h.b16 %v110
    %v376 = vunpack.c.l.b16 %v111
    %v377 = vunpack.c.h.b16 %v111
    %v378 = vunpack.c.l.b16 %v112
    %v379 = vunpack.c.h.b16 %v112
    %v380 = vunpack.c.l.b16 %v113
    %v381 = vunpack.c.h.b16 %v113
    %v382 = vunpack.c.l.b16 %v114
    %v383 = vunpack.c.h.b16 %v114
    %v384 = vunpack.c.l.b16 %v115
    %v385 = vunpack.c.h.b16 %v115
    %v386 = vunpack.c.l.b16 %v116
    %v387 = vunpack.c.h.b16 %v116
    %v388 = vunpack.c.l.b16 %v117
    %v389 = vunpack.c.h.b16 %v117
    %v390 = vunpack.c.l.b16 %v118
    %v391 = vunpack.c.h.b16 %v118
    %v392 = vunpack.c.l.b16 %v119
    %v393 = vunpack.c.h.b16 %v119
    %v394 = vunpack.c.l.b16 %v120
    %v395 = vunpack.c.h.b16 %v120
    %v396 = vunpack.c.l.b16 %v121
    %v397 = vunpack.c.h.b16 %v121
    %v398 = vunpack.c.l.b16 %v122
    %v399 = vunpack.c.h.b16 %v122
    %v400 = vunpack.c.l.b16 %v123
    %v401 = vunpack.c.h.b16 %v123
    %v402 = vunpack.c.l.b16 %v124
    %v403 = vunpack.c.h.b16 %v124
    %v404 = vunpack.c.l.b16 %v125
    %v405 = vunpack.c.h.b16 %v125
    %v406 = vunpack.c.l.b16 %v126
    %v407 = vunpack.c.h.b16 %v126
    %v408 = vunpack.c.l.b16 %v127
    %v409 = vunpack.c.h.b16 %v127
    %v410 = vunpack.c.l.b16 %v128
    %v411 = vunpack.c.h.b16 %v128
    %v412 = vunpack.c.l.b16 %v129
    %v413 = vunpack.c.h.b16 %v129
    %v414 = vunpack.c.l.b16 %v130
    %v415 = vunpack.c.h.b16 %v130
    %v416 = vunpack.c.l.b16 %v131
    %v417 = vunpack.c.h.b16 %v131
    %v418 = vunpack.c.l.b16 %v132
    %v419 = vunpack.c.h.b16 %v132
    %v420 = vunpack.c.l.b16 %v133
    %v421 = vunpack.c.h.b16 %v133
    %v422 = vunpack.c.l.b16 %v134
    %v423 = vunpack.c.h.b16 %v134
    %v424 = vunpack.c.l.b16 %v135
    %v425 = vunpack.c.h.b16 %v135
    %v426 = vunpack.c.l.b16 %v136
    %v427 = vunpack.c.h.b16 %v136
    %v428 = vunpack.c.l.b16 %v137
    %v429 = vunpack.c.h.b16 %v137
    %v430 = vunpack.c.l.b16 %v138
    %v431 = vunpack.c.h.b16 %v138
    %v432 = vunpack.c.l.b16 %v139
    %v433 = vunpack.c.h.b16 %v139
    %v434 = vunpack.c.l.b16 %v140
    %v435 = vunpack.c.h.b16 %v140
    %v436 = vunpack.c.l.b16 %v141
    %v437 = vunpack.c.h.b16 %v141
    %v438 = vunpack.c.l.b16 %v142
    %v439 = vunpack.c.h.b16 %v142
    %v440 = vunpack.c.l.b16 %v143
    %v441 = vunpack.c.h.b16 %v143
    %v442 = vunpack.c.l.b16 %v144
    %v443 = vunpack.c.h.b16 %v144
    %v444 = vunpack.c.l.b16 %v145
    %v445 = vunpack.c.h.b16 %v145
    %v446 = vunpack.c.l.b16 %v146
    %v447 = vunpack.c.h.b16 %v146
    %v448 = vunpack.c.l.b16 %v147
    %v449 = vunpack.c.h.b16 %v147
    %v450 = vunpack.c.l.b16 %v148
    %v451 = vunpack.c.h.b16 %v148
    %v452 = vunpack.c.l.b16 %v149
    %v453 = vunpack.c.h.b16 %v149
    %v454 = vunpack.c.l.b16 %v150
    %v455 = vunpack.c.h.b16 %v150
    %v456 = vunpack.c.l.b16 %v151
    %v457 = vunpack.c.h.b16 %v151
    %v458 = vunpack.c.l.b16 %v152
    %v459 = vunpack.c.h.b16 %v152
    %v460 = vunpack.c.l.b16 %v153
    %v461 = vunpack.c.h.b16 %v153
    %v462 = vunpack.c.l.b16 %v154
    %v463 = vunpack.c.h.b16 %v154
    %v464 = vunpack.c.l.b16 %v155
    %v465 = vunpack.c.h.b16 %v155
    %v466 = vunpack.c.l.b16 %v156
    %v467 = vunpack.c.h.b16 %v156
    %v468 = vunpack.c.l.b16 %v157
    %v469 = vunpack.c.h.b16 %v157
    %v470 = vunpack.c.l.b16 %v158
    %v471 = vunpack.c.h.b16 %v158
    %v472 = vunpack.c.l.b16 %v159
    %v473 = vunpack.c.h.b16 %v159
    %v474 = vunpack.c.l.b16 %v160
    %v475 = vunpack.c.h.b16 %v160
    %v476 = vunpack.c.l.b16 %v161
    %v477 = vunpack.c.h.b16 %v161
    %v478 = vunpack.c.l.b16 %v162
    %v479 = vunpack.c.h.b16 %v162
    %v480 = vunpack.c.l.b16 %v163
    %v481 = vunpack.c.h.b16 %v163
    %v482 = vunpack.c.l.b16 %v164
    %v483 = vunpack.c.h.b16 %v164
    %v484 = vunpack.c.l.b16 %v165
    %v485 = vunpack.c.h.b16 %v165
    %v486 = vunpack.c.l.b16 %v166
    %v487 = vunpack.c.h.b16 %v166
    %v488 = vunpack.c.l.b16 %v167
    %v489 = vunpack.c.h.b16 %v167
    %v490 = vunpack.c.l.b16 %v168
    %v491 = vunpack.c.h.b16 %v168
    %v492 = vunpack.c.l.b16 %v169
    %v493 = vunpack.c.h.b16 %v169
    %v494 = vunpack.c.l.b16 %v170
    %v495 = vunpack.c.h.b16 %v170
    %v496 = vunpack.c.l.b16 %v171
    %v497 = vunpack.c.h.b16 %v171
    %v498 = vunpack.c.l.b16 %v172
    %v499 = vunpack.c.h.b16 %v172
    %v500 = vunpack.c.l.b16 %v173
    %v501 = vunpack.c.h.b16 %v173
    %v502 = vunpack.c.l.b16 %v174
    %v503 = vunpack.c.h.b16 %v174
    %v504 = vunpack.c.l.b16 %v175
    %v505 = vunpack.c.h.b16 %v175
    %v506 = vunpack.c.l.b16 %v176
    %v507 = vunpack.c.h.b16 %v176
    %v508 = vunpack.c.l.b16 %v177
    %v509 = vunpack.c.h.b16 %v177
    %v510 = vunpack.c.l.b16 %v178
    %v511 = vunpack.c.h.b16 %v178
    %v512 = vunpack.c.l.b16 %v179
    %v513 = vunpack.c.h.b16 %v179
    %v514 = vunpack.c.l.b16 %v180
    %v515 = vunpack.c.h.b16 %v180
    %v516 = vunpack.c.l.b16 %v181
    %v517 = vunpack.c.h.b16 %v181
    %v518 = vpack.c.b16 %v296, %v294
    %v519 = vpack.c.b16 %v297, %v295
    %v520 = vpack.c.b16 %v300, %v298
    %v521 = vpack.c.b16 %v301, %v299
    %v522 = vpack.c.b16 %v304, %v302
    %v523 = vpack.c.b16 %v305, %v303
    %v524 = vpack.c.b16 %v308, %v306
    %v525 = vpack.c.b16 %v309, %v307
    %v526 = vpack.c.b16 %v312, %v310
    %v527 = vpack.c.b16 %v313, %v311
    %v528 = vpack.c.b16 %v316, %v314
    %v529 = vpack.c.b16 %v317, %v315
    %v530 = vpack.c.b16 %v320, %v318
    %v531 = vpack.c.b16 %v321, %v319
    %v532 = vpack.c.b16 %v324, %v322
    %v533 = vpack.c.b16 %v325, %v323
    %v534 = vpack.c.b16 %v328, %v326
    %v535 = vpack.c.b16 %v329, %v327
    %v536 = vpack.c.b16 %v332, %v330
    %v537 = vpack.c.b16 %v333, %v331
    %v538 = vpack.c.b16 %v336, %v334
    %v539 = vpack.c.b16 %v337, %v335
    %v540 = vpack.c.b16 %v340, %v338
    %v541 = vpack.c.b16 %v341, %v339
    %v542 = vpack.c.b16 %v344, %v342
    %v543 = vpack.c.b16 %v345, %v343
    %v544 = vpack.c.b16 %v348, %v346
    %v545 = vpack.c.b16 %v349, %v347
    %v546 = vpack.c.b16 %v352, %v350
    %v547 = vpack.c.b16 %v353, %v351
    %v548 = vpack.c.b16 %v356, %v354
    %v549 = vpack.c.b16 %v357, %v355
    %v550 = vpack.c.b16 %v360, %v358
    %v551 = vpack.c.b16 %v361, %v359
    %v552 = vpack.c.b16 %v364, %v362
    %v553 = vpack.c.b16 %v365, %v363
    %v554 = vpack.c.b16 %v368, %v366
    %v555 = vpack.c.b16 %v369, %v367
    %v556 = vpack.c.b16 %v372, %v370
    %v557 = vpack.c.b16 %v373, %v371
    %v558 = vpack.c.b16 %v376, %v374
    %v559 = vpack.c.b16 %v377, %v375
    %v560 = vpack.c.b16 %v380, %v378
    %v561 = vpack.c.b16 %v381, %v379
    %v562 = vpack.c.b16 %v384, %v382
    %v563 = vpack.c.b16 %v385, %v383
    %v564 = vpack.c.b16 %v388, %v386
    %v565 = vpack.c.b16 %v389, %v387
    %v566 = vpack.c.b16 %v392, %v390
    %v567 = vpack.c.b16 %v393, %v391
    %v568 = vpack.c.b16 %v396, %v394
    %v569 = vpack.c.b16 %v397, %v395
    %v570 = vpack.c.b16 %v400, %v398
    %v571 = vpack.c.b16 %v401, %v399
    %v572 = vpack.c.b16 %v404, %v402
    %v573 = vpack.c.b16 %v405, %v403
    %v574 = vpack.c.b16 %v408, %v406
    %v575 = vpack.c.b16 %v409, %v407
    %v576 = vpack.c.b16 %v412, %v410
    %v577 = vpack.c.b16 %v413, %v411
    %v578 = vpack.c.b16 %v416, %v414
    %v579 = vpack.c.b16 %v417, %v415
    %v580 = vpack.c.b16 %v420, %v418
    %v581 = vpack.c.b16 %v421, %v419
    %v582 = vpack.c.b16 %v424, %v422
    %v583 = vpack.c.b16 %v425, %v423
    %v584 = vpack.c.b16 %v428, %v426
    %v585 = vpack.c.b16 %v429, %v427
    %v586 = vpack.c.b16 %v432, %v430
    %v587 = vpack.c.b16 %v433, %v431
    %v588 = vpack.c.b16 %v436, %v434
    %v589 = vpack.c.b16 %v437, %v435
    %v590 = vpack.c.b16 %v440, %v438
    %v591 = vpack.c.b16 %v441, %v439
    %v592 = vpack.c.b16 %v444, %v442
    %v593 = vpack.c.b16 %v445, %v443
    %v594 = vpack.c.b16 %v448, %v446
    %v595 = vpack.c.b16 %v449, %v447
    %v596 = vpack.c.b16 %v452, %v450
    %v597 = vpack.c.b16 %v453, %v451
    %v598 = vpack.c.b16 %v456, %v454
    %v599 = vpack.c.b16 %v457, %v455
    %v600 = vpack.c.b16 %v460, %v458
    %v601 = vpack.c.b16 %v461, %v459
    %v602 = vpack.c.b16 %v464, %v462
    %v603 = vpack.c.b16 %v465, %v463
    %v604 = vpack.c.b16 %v468, %v466
    %v605 = vpack.c.b16 %v469, %v467
    %v606 = vpack.c.b16 %v472, %v470
    %v607 = vpack.c.b16 %v473, %v471
    %v608 = vpack.c.b16 %v476, %v474
    %v609 = vpack.c.b16 %v477, %v475
    %v610 = vpack.c.b16 %v480, %v478
    %v611 = vpack.c.b16 %v481, %v479
    %v612 = vpack.c.b16 %v484, %v482
    %v613 = vpack.c.b16 %v485, %v483
    %v614 = vpack.c.b16 %v488, %v486
    %v615 = vpack.c.b16 %v489, %v487
    %v616 = vpack.c.b16 %v492, %v490
    %v617 = vpack.c.b16 %v493, %v491
    %v618 = vpack.c.b16 %v496, %v494
    %v619 = vpack.c.b16 %v497, %v495
    %v620 = vpack.c.b16 %v500, %v498
    %v621 = vpack.c.b16 %v501, %v499
    %v622 = vpack.c.b16 %v504, %v502
    %v623 = vpack.c.b16 %v505, %v503
    %v624 = vpack.c.b16 %v508, %v506
    %v625 = vpack.c.b16 %v509, %v507
    %v626 = vpack.c.b16 %v512, %v510
    %v627 = vpack.c.b16 %v513, %v511
    %v628 = vpack.c.b16 %v516, %v514
    %v629 = vpack.c.b16 %v517, %v515
    %742 = vmatprep.subr.bf16.mxu0 %v519
    %743 = vmatpush1.bf16.msra.mxu0 %v518
    %744 = vmatprep.subr.bf16.mxu0 %v521
    %745 = vmatpush1.bf16.msra.mxu0 %v520
    %746 = vmatprep.subr.bf16.mxu0 %v523
    %747 = vmatpush1.bf16.msra.mxu0 %v522
    %748 = vmatprep.subr.bf16.mxu0 %v525
    %749 = vmatpush1.bf16.msra.mxu0 %v524
    %750 = vmatprep.subr.bf16.mxu0 %v527
    %751 = vmatpush1.bf16.msra.mxu0 %v526
    %752 = vmatprep.subr.bf16.mxu0 %v529
    %753 = vmatpush1.bf16.msra.mxu0 %v528
    %754 = vmatprep.subr.bf16.mxu0 %v531
    %755 = vmatpush1.bf16.msra.mxu0 %v530
    %756 = vmatprep.subr.bf16.mxu0 %v533
    %757 = vmatpush1.bf16.msra.mxu0 %v532
    %758 = vmatprep.subr.bf16.mxu0 %v535
    %759 = vmatpush1.bf16.msra.mxu0 %v534
    %760 = vmatprep.subr.bf16.mxu0 %v537
    %761 = vmatpush1.bf16.msra.mxu0 %v536
    %762 = vmatprep.subr.bf16.mxu0 %v539
    %763 = vmatpush1.bf16.msra.mxu0 %v538
    %764 = vmatprep.subr.bf16.mxu0 %v541
    %765 = vmatpush1.bf16.msra.mxu0 %v540
    %766 = vmatprep.subr.bf16.mxu0 %v543
    %767 = vmatpush1.bf16.msra.mxu0 %v542
    %768 = vmatprep.subr.bf16.mxu0 %v545
    %769 = vmatpush1.bf16.msra.mxu0 %v544
    %770 = vmatprep.subr.bf16.mxu0 %v547
    %771 = vmatpush1.bf16.msra.mxu0 %v546
    %772 = vmatprep.subr.bf16.mxu0 %v549
    %773 = vmatpush1.bf16.msra.mxu0 %v548
    %774 = vmatprep.mubr.bf16.mxu0 %v64
    %775 = vmatmul.mubr.bf16.gmra.mrb[0].mxu0 %v63
    %v776 = vpop.f32.mrb[0].mxu0
    %v777 = vadd.f32 0.0, %v776
    %v778 = vpop.f32.mrb[0].mxu0
    %v779 = vadd.f32 0.0, %v778
    %v780 = vpop.f32.mrb[0].mxu0
    %v781 = vpop.f32.mrb[0].mxu0
    %782 = vdwg.mxu0
    %783 = vmatprep.subr.bf16.mxu0 %v551
    %784 = vmatpush1.bf16.msra.mxu0 %v550
    %785 = vmatprep.subr.bf16.mxu0 %v553
    %786 = vmatpush1.bf16.msra.mxu0 %v552
    %787 = vmatprep.subr.bf16.mxu0 %v555
    %788 = vmatpush1.bf16.msra.mxu0 %v554
    %789 = vmatprep.subr.bf16.mxu0 %v557
    %790 = vmatpush1.bf16.msra.mxu0 %v556
    %791 = vmatprep.subr.bf16.mxu0 %v559
    %792 = vmatpush1.bf16.msra.mxu0 %v558
    %793 = vmatprep.subr.bf16.mxu0 %v561
    %794 = vmatpush1.bf16.msra.mxu0 %v560
    %795 = vmatprep.subr.bf16.mxu0 %v563
    %796 = vmatpush1.bf16.msra.mxu0 %v562
    %797 = vmatprep.subr.bf16.mxu0 %v565
    %798 = vmatpush1.bf16.msra.mxu0 %v564
    %799 = vmatprep.subr.bf16.mxu0 %v567
    %800 = vmatpush1.bf16.msra.mxu0 %v566
    %801 = vmatprep.subr.bf16.mxu0 %v569
    %802 = vmatpush1.bf16.msra.mxu0 %v568
    %803 = vmatprep.subr.bf16.mxu0 %v571
    %804 = vmatpush1.bf16.msra.mxu0 %v570
    %805 = vmatprep.subr.bf16.mxu0 %v573
    %806 = vmatpush1.bf16.msra.mxu0 %v572
    %807 = vmatprep.subr.bf16.mxu0 %v575
    %808 = vmatpush1.bf16.msra.mxu0 %v574
    %809 = vmatprep.subr.bf16.mxu0 %v577
    %810 = vmatpush1.bf16.msra.mxu0 %v576
    %811 = vmatprep.subr.bf16.mxu0 %v579
    %812 = vmatpush1.bf16.msra.mxu0 %v578
    %813 = vmatprep.subr.bf16.mxu0 %v581
    %814 = vmatpush1.bf16.msra.mxu0 %v580
    %815 = vmatprep.mubr.bf16.mxu0 %v66
    %816 = vmatmul.mubr.bf16.gmra.mrb[0].mxu0 %v65
    %v817 = vpop.f32.mrb[0].mxu0
    %v818 = vadd.f32 %v777, %v817
    %v819 = vpop.f32.mrb[0].mxu0
    %v820 = vadd.f32 %v779, %v819
    %v821 = vpop.f32.mrb[0].mxu0
    %v822 = vpop.f32.mrb[0].mxu0
    %823 = vdwg.mxu0
    %824 = vmatprep.subr.bf16.mxu0 %v583
    %825 = vmatpush1.bf16.msra.mxu0 %v582
    %826 = vmatprep.subr.bf16.mxu0 %v585
    %827 = vmatpush1.bf16.msra.mxu0 %v584
    %828 = vmatprep.subr.bf16.mxu0 %v587
    %829 = vmatpush1.bf16.msra.mxu0 %v586
    %830 = vmatprep.subr.bf16.mxu0 %v589
    %831 = vmatpush1.bf16.msra.mxu0 %v588
    %832 = vmatprep.subr.bf16.mxu0 %v591
    %833 = vmatpush1.bf16.msra.mxu0 %v590
    %834 = vmatprep.subr.bf16.mxu0 %v593
    %835 = vmatpush1.bf16.msra.mxu0 %v592
    %836 = vmatprep.subr.bf16.mxu0 %v595
    %837 = vmatpush1.bf16.msra.mxu0 %v594
    %838 = vmatprep.subr.bf16.mxu0 %v597
    %839 = vmatpush1.bf16.msra.mxu0 %v596
    %840 = vmatprep.subr.bf16.mxu0 %v599
    %841 = vmatpush1.bf16.msra.mxu0 %v598
    %842 = vmatprep.subr.bf16.mxu0 %v601
    %843 = vmatpush1.bf16.msra.mxu0 %v600
    %844 = vmatprep.subr.bf16.mxu0 %v603
    %845 = vmatpush1.bf16.msra.mxu0 %v602
    %846 = vmatprep.subr.bf16.mxu0 %v605
    %847 = vmatpush1.bf16.msra.mxu0 %v604
    %848 = vmatprep.subr.bf16.mxu0 %v607
    %849 = vmatpush1.bf16.msra.mxu0 %v606
    %850 = vmatprep.subr.bf16.mxu0 %v609
    %851 = vmatpush1.bf16.msra.mxu0 %v608
    %852 = vmatprep.subr.bf16.mxu0 %v611
    %853 = vmatpush1.bf16.msra.mxu0 %v610
    %854 = vmatprep.subr.bf16.mxu0 %v613
    %855 = vmatpush1.bf16.msra.mxu0 %v612
    %856 = vmatprep.mubr.bf16.mxu0 %v68
    %857 = vmatmul.mubr.bf16.gmra.mrb[0].mxu0 %v67
    %v858 = vpop.f32.mrb[0].mxu0
    %v859 = vadd.f32 %v818, %v858
    %v860 = vpop.f32.mrb[0].mxu0
    %v861 = vadd.f32 %v820, %v860
    %v862 = vpop.f32.mrb[0].mxu0
    %v863 = vpop.f32.mrb[0].mxu0
    %864 = vdwg.mxu0
    %865 = vmatprep.subr.bf16.mxu0 %v615
    %866 = vmatpush1.bf16.msra.mxu0 %v614
    %867 = vmatprep.subr.bf16.mxu0 %v617
    %868 = vmatpush1.bf16.msra.mxu0 %v616
    %869 = vmatprep.subr.bf16.mxu0 %v619
    %870 = vmatpush1.bf16.msra.mxu0 %v618
    %871 = vmatprep.subr.bf16.mxu0 %v621
    %872 = vmatpush1.bf16.msra.mxu0 %v620
    %873 = vmatprep.subr.bf16.mxu0 %v623
    %874 = vmatpush1.bf16.msra.mxu0 %v622
    %875 = vmatprep.subr.bf16.mxu0 %v625
    %876 = vmatpush1.bf16.msra.mxu0 %v624
    %877 = vmatprep.subr.bf16.mxu0 %v627
    %878 = vmatpush1.bf16.msra.mxu0 %v626
    %879 = vmatprep.subr.bf16.mxu0 %v629
    %880 = vmatpush1.bf16.msra.mxu0 %v628
    %881 = vmatprep.subr.bf16.mxu0 0
    %882 = vmatpush1.bf16.msra.mxu0 0
    %883 = vmatprep.subr.bf16.mxu0 0
    %884 = vmatpush1.bf16.msra.mxu0 0
    %885 = vmatprep.subr.bf16.mxu0 0
    %886 = vmatpush1.bf16.msra.mxu0 0
    %887 = vmatprep.subr.bf16.mxu0 0
    %888 = vmatpush1.bf16.msra.mxu0 0
    %889 = vmatprep.subr.bf16.mxu0 0
    %890 = vmatpush1.bf16.msra.mxu0 0
    %891 = vmatprep.subr.bf16.mxu0 0
    %892 = vmatpush1.bf16.msra.mxu0 0
    %893 = vmatprep.subr.bf16.mxu0 0
    %894 = vmatpush1.bf16.msra.mxu0 0
    %895 = vmatprep.subr.bf16.mxu0 0
    %896 = vmatpush1.bf16.msra.mxu0 0
    %897 = vmatprep.mubr.bf16.mxu0 0
    %898 = vmatmul.mubr.bf16.gmra.mrb[0].mxu0 %v69
    %v899 = vpop.f32.mrb[0].mxu0
    %v900 = vadd.f32 %v859, %v899
    %v901 = vpop.f32.mrb[0].mxu0
    %v902 = vadd.f32 %v861, %v901
    %v903 = vpop.f32.mrb[0].mxu0
    %v904 = vpop.f32.mrb[0].mxu0
    %905 = vdwg.mxu0
    %v906 = vld [vmem:[%s2] sm:$0xf]
    %v907 = vrot.slane %v900, 4
    %v908 = vadd.f32 %v900, %v907
    %v909 = vrot.slane %v908, 2
    %v910 = vadd.f32 %v908, %v909
    %v911 = vrot.slane %v910, 1
    %v912 = vadd.f32 %v910, %v911
    %v913 = vrot.slane %v902, 4
    %v914 = vadd.f32 %v902, %v913
    %v915 = vrot.slane %v914, 2
    %v916 = vadd.f32 %v914, %v915
    %v917 = vrot.slane %v916, 1
    %v918 = vadd.f32 %v916, %v917
    %v919 = vrcp.pop 8.0
    %v920 = vmul.f32 %v912, %v919
    %v921 = vmul.f32 %v918, %v919
    %v922 = vmul.f32 %v900, %v900
    %v923 = vmul.f32 %v902, %v902
    %v924 = vrot.slane %v922, 4
    %v925 = vadd.f32 %v922, %v924
    %v926 = vrot.slane %v925, 2
    %v927 = vadd.f32 %v925, %v926
    %v928 = vrot.slane %v927, 1
    %v929 = vadd.f32 %v927, %v928
    %v930 = vrot.slane %v923, 4
    %v931 = vadd.f32 %v923, %v930
    %v932 = vrot.slane %v931, 2
    %v933 = vadd.f32 %v931, %v932
    %v934 = vrot.slane %v933, 1
    %v935 = vadd.f32 %v933, %v934
    %v936 = vmul.f32 %v929, %v919
    %v937 = vmul.f32 %v935, %v919
    %v938 = vmul.f32 %v920, %v920
    %v939 = vmul.f32 %v921, %v921
    %v940 = vsub.f32 %v936, %v938
    %v941 = vsub.f32 %v937, %v939
    %v942 = vmax.f32 %v940, 0.0
    %v943 = vmax.f32 %v941, 0.0
    %v944 = vsub.f32 %v900, %v920
    %v945 = vsub.f32 %v902, %v921
    %v946 = vadd.f32 %v942, 1e-05
    %v947 = vadd.f32 %v943, 1e-05
    %v948 = vrsqrt.pop %v946
    %v949 = vrsqrt.pop %v947
    %v950 = vmul.f32 %v944, %v948
    %v951 = vmul.f32 %v945, %v949
    %v953 = vlaneseq
    %v954 = vshrl.u32 %v953, 7
    %v955 = vsub.s32 0, %v954
    %v956 = vrot.slane %v906, %v955
    %v957 = vlaneseq
    %v958 = vshrl.u32 %v957, 7
    %v959 = vsub.s32 2, %v958
    %v960 = vrot.slane %v906, %v959
    %v963 = vlaneseq
    %v964 = vshrl.u32 %v963, 7
    %v965 = vsub.s32 0, %v964
    %v966 = vrot.slane %v956, %v965
    %v967 = vlaneseq
    %v968 = vshrl.u32 %v967, 7
    %v969 = vsub.s32 0, %v968
    %v970 = vrot.slane %v960, %v969
    %v971 = vmul.f32 %v950, %v966
    %v972 = vmul.f32 %v951, %v970
    %v973 = vlaneseq
    %v974 = vshrl.u32 %v973, 7
    %v975 = vsub.s32 1, %v974
    %v976 = vrot.slane %v906, %v975
    %v977 = vlaneseq
    %v978 = vshrl.u32 %v977, 7
    %v979 = vsub.s32 3, %v978
    %v980 = vrot.slane %v906, %v979
    %v983 = vlaneseq
    %v984 = vshrl.u32 %v983, 7
    %v985 = vsub.s32 1, %v984
    %v986 = vrot.slane %v976, %v985
    %v987 = vlaneseq
    %v988 = vshrl.u32 %v987, 7
    %v989 = vsub.s32 1, %v988
    %v990 = vrot.slane %v980, %v989
    %v991 = vadd.f32 %v971, %v986
    %v992 = vadd.f32 %v972, %v990
    %v993 = vmax.f32 %v991, 0.0
    %v994 = vmax.f32 %v992, 0.0
    %v995 = vpack.c.bf16 %v993, %v993
    %v996 = vpack.c.bf16 %v994, %v994
    %v997 = vld [vmem:[#allocation2] sm:$0xff]
    %v998 = vld [vmem:[#allocation2 + $0x8] sm:$0xff]
    %v999 = vld [vmem:[#allocation2 + $0x10] sm:$0xff]
    %v1000 = vld [vmem:[#allocation2 + $0x18] sm:$0xff]
    %v1001 = vld [vmem:[#allocation2 + $0x20] sm:$0xff]
    %v1002 = vld [vmem:[#allocation2 + $0x28] sm:$0xff]
    %v1003 = vld [vmem:[#allocation2 + $0x30] sm:$0xff]
    %v1004 = vld [vmem:[#allocation2 + $0x38] sm:$0xff]
    %v1005 = vld [vmem:[#allocation2 + $0x40] sm:$0xff]
    %v1006 = vld [vmem:[#allocation2 + $0x48] sm:$0xff]
    %v1007 = vld [vmem:[#allocation2 + $0x50] sm:$0xff]
    %v1008 = vld [vmem:[#allocation2 + $0x58] sm:$0xff]
    %v1009 = vld [vmem:[#allocation2 + $0x60] sm:$0xff]
    %v1010 = vld [vmem:[#allocation2 + $0x68] sm:$0xff]
    %v1011 = vld [vmem:[#allocation2 + $0x70] sm:$0xff]
    %v1012 = vld [vmem:[#allocation2 + $0x78] sm:$0xff]
    %v1013 = vld [vmem:[#allocation2 + $0x80] sm:$0xff]
    %v1014 = vld [vmem:[#allocation2 + $0x88] sm:$0xff]
    %v1015 = vld [vmem:[#allocation2 + $0x90] sm:$0xff]
    %v1016 = vld [vmem:[#allocation2 + $0x98] sm:$0xff]
    %v1017 = vld [vmem:[#allocation2 + $0xa0] sm:$0xff]
    %v1018 = vld [vmem:[#allocation2 + $0xa8] sm:$0xff]
    %v1019 = vld [vmem:[#allocation2 + $0xb0] sm:$0xff]
    %v1020 = vld [vmem:[#allocation2 + $0xb8] sm:$0xff]
    %v1021 = vld [vmem:[#allocation2 + $0xc0] sm:$0xff]
    %v1022 = vld [vmem:[#allocation2 + $0xc8] sm:$0xff]
    %v1023 = vld [vmem:[#allocation2 + $0xd0] sm:$0xff]
    %v1024 = vld [vmem:[#allocation2 + $0xd8] sm:$0xff]
    %v1025 = vld [vmem:[#allocation2 + $0xe0] sm:$0xff]
    %v1026 = vld [vmem:[#allocation2 + $0xe8] sm:$0xff]
    %v1027 = vld [vmem:[#allocation2 + $0xf0] sm:$0xff]
    %v1028 = vld [vmem:[#allocation2 + $0xf8] sm:$0xff]
    %v1061 = vunpack.c.l.b16 %v997
    %v1062 = vunpack.c.h.b16 %v997
    %v1063 = vunpack.c.l.b16 %v998
    %v1064 = vunpack.c.h.b16 %v998
    %v1065 = vunpack.c.l.b16 %v999
    %v1066 = vunpack.c.h.b16 %v999
    %v1067 = vunpack.c.l.b16 %v1000
    %v1068 = vunpack.c.h.b16 %v1000
    %v1069 = vunpack.c.l.b16 %v1001
    %v1070 = vunpack.c.h.b16 %v1001
    %v1071 = vunpack.c.l.b16 %v1002
    %v1072 = vunpack.c.h.b16 %v1002
    %v1073 = vunpack.c.l.b16 %v1003
    %v1074 = vunpack.c.h.b16 %v1003
    %v1075 = vunpack.c.l.b16 %v1004
    %v1076 = vunpack.c.h.b16 %v1004
    %v1077 = vunpack.c.l.b16 %v1005
    %v1078 = vunpack.c.h.b16 %v1005
    %v1079 = vunpack.c.l.b16 %v1006
    %v1080 = vunpack.c.h.b16 %v1006
    %v1081 = vunpack.c.l.b16 %v1007
    %v1082 = vunpack.c.h.b16 %v1007
    %v1083 = vunpack.c.l.b16 %v1008
    %v1084 = vunpack.c.h.b16 %v1008
    %v1085 = vunpack.c.l.b16 %v1009
    %v1086 = vunpack.c.h.b16 %v1009
    %v1087 = vunpack.c.l.b16 %v1010
    %v1088 = vunpack.c.h.b16 %v1010
    %v1089 = vunpack.c.l.b16 %v1011
    %v1090 = vunpack.c.h.b16 %v1011
    %v1091 = vunpack.c.l.b16 %v1012
    %v1092 = vunpack.c.h.b16 %v1012
    %v1093 = vunpack.c.l.b16 %v1013
    %v1094 = vunpack.c.h.b16 %v1013
    %v1095 = vunpack.c.l.b16 %v1014
    %v1096 = vunpack.c.h.b16 %v1014
    %v1097 = vunpack.c.l.b16 %v1015
    %v1098 = vunpack.c.h.b16 %v1015
    %v1099 = vunpack.c.l.b16 %v1016
    %v1100 = vunpack.c.h.b16 %v1016
    %v1101 = vunpack.c.l.b16 %v1017
    %v1102 = vunpack.c.h.b16 %v1017
    %v1103 = vunpack.c.l.b16 %v1018
    %v1104 = vunpack.c.h.b16 %v1018
    %v1105 = vunpack.c.l.b16 %v1019
    %v1106 = vunpack.c.h.b16 %v1019
    %v1107 = vunpack.c.l.b16 %v1020
    %v1108 = vunpack.c.h.b16 %v1020
    %v1109 = vunpack.c.l.b16 %v1021
    %v1110 = vunpack.c.h.b16 %v1021
    %v1111 = vunpack.c.l.b16 %v1022
    %v1112 = vunpack.c.h.b16 %v1022
    %v1113 = vunpack.c.l.b16 %v1023
    %v1114 = vunpack.c.h.b16 %v1023
    %v1115 = vunpack.c.l.b16 %v1024
    %v1116 = vunpack.c.h.b16 %v1024
    %v1117 = vunpack.c.l.b16 %v1025
    %v1118 = vunpack.c.h.b16 %v1025
    %v1119 = vunpack.c.l.b16 %v1026
    %v1120 = vunpack.c.h.b16 %v1026
    %v1121 = vunpack.c.l.b16 %v1027
    %v1122 = vunpack.c.h.b16 %v1027
    %v1123 = vunpack.c.l.b16 %v1028
    %v1124 = vunpack.c.h.b16 %v1028
    %v1125 = vpack.c.b16 %v1063, %v1061
    %v1126 = vpack.c.b16 %v1064, %v1062
    %v1127 = vpack.c.b16 %v1067, %v1065
    %v1128 = vpack.c.b16 %v1068, %v1066
    %v1129 = vpack.c.b16 %v1071, %v1069
    %v1130 = vpack.c.b16 %v1072, %v1070
    %v1131 = vpack.c.b16 %v1075, %v1073
    %v1132 = vpack.c.b16 %v1076, %v1074
    %v1133 = vpack.c.b16 %v1079, %v1077
    %v1134 = vpack.c.b16 %v1080, %v1078
    %v1135 = vpack.c.b16 %v1083, %v1081
    %v1136 = vpack.c.b16 %v1084, %v1082
    %v1137 = vpack.c.b16 %v1087, %v1085
    %v1138 = vpack.c.b16 %v1088, %v1086
    %v1139 = vpack.c.b16 %v1091, %v1089
    %v1140 = vpack.c.b16 %v1092, %v1090
    %v1141 = vpack.c.b16 %v1095, %v1093
    %v1142 = vpack.c.b16 %v1096, %v1094
    %v1143 = vpack.c.b16 %v1099, %v1097
    %v1144 = vpack.c.b16 %v1100, %v1098
    %v1145 = vpack.c.b16 %v1103, %v1101
    %v1146 = vpack.c.b16 %v1104, %v1102
    %v1147 = vpack.c.b16 %v1107, %v1105
    %v1148 = vpack.c.b16 %v1108, %v1106
    %v1149 = vpack.c.b16 %v1111, %v1109
    %v1150 = vpack.c.b16 %v1112, %v1110
    %v1151 = vpack.c.b16 %v1115, %v1113
    %v1152 = vpack.c.b16 %v1116, %v1114
    %v1153 = vpack.c.b16 %v1119, %v1117
    %v1154 = vpack.c.b16 %v1120, %v1118
    %v1155 = vpack.c.b16 %v1123, %v1121
    %v1156 = vpack.c.b16 %v1124, %v1122
    %1189 = vmatprep.subr.bf16.mxu0 %v1126
    %1190 = vmatpush1.bf16.msra.mxu0 %v1125
    %1191 = vmatprep.subr.bf16.mxu0 %v1128
    %1192 = vmatpush1.bf16.msra.mxu0 %v1127
    %1193 = vmatprep.subr.bf16.mxu0 %v1130
    %1194 = vmatpush1.bf16.msra.mxu0 %v1129
    %1195 = vmatprep.subr.bf16.mxu0 %v1132
    %1196 = vmatpush1.bf16.msra.mxu0 %v1131
    %1197 = vmatprep.subr.bf16.mxu0 %v1134
    %1198 = vmatpush1.bf16.msra.mxu0 %v1133
    %1199 = vmatprep.subr.bf16.mxu0 %v1136
    %1200 = vmatpush1.bf16.msra.mxu0 %v1135
    %1201 = vmatprep.subr.bf16.mxu0 %v1138
    %1202 = vmatpush1.bf16.msra.mxu0 %v1137
    %1203 = vmatprep.subr.bf16.mxu0 %v1140
    %1204 = vmatpush1.bf16.msra.mxu0 %v1139
    %1205 = vmatprep.subr.bf16.mxu0 %v1142
    %1206 = vmatpush1.bf16.msra.mxu0 %v1141
    %1207 = vmatprep.subr.bf16.mxu0 %v1144
    %1208 = vmatpush1.bf16.msra.mxu0 %v1143
    %1209 = vmatprep.subr.bf16.mxu0 %v1146
    %1210 = vmatpush1.bf16.msra.mxu0 %v1145
    %1211 = vmatprep.subr.bf16.mxu0 %v1148
    %1212 = vmatpush1.bf16.msra.mxu0 %v1147
    %1213 = vmatprep.subr.bf16.mxu0 %v1150
    %1214 = vmatpush1.bf16.msra.mxu0 %v1149
    %1215 = vmatprep.subr.bf16.mxu0 %v1152
    %1216 = vmatpush1.bf16.msra.mxu0 %v1151
    %1217 = vmatprep.subr.bf16.mxu0 %v1154
    %1218 = vmatpush1.bf16.msra.mxu0 %v1153
    %1219 = vmatprep.subr.bf16.mxu0 %v1156
    %1220 = vmatpush1.bf16.msra.mxu0 %v1155
    %1221 = vmatprep.mubr.bf16.mxu0 %v996
    %1222 = vmatmul.mubr.bf16.gmra.mrb[0].mxu0 %v995
    %v1223 = vpop.f32.mrb[0].mxu0
    %v1224 = vadd.f32 0.0, %v1223
    %v1225 = vpop.f32.mrb[0].mxu0
    %v1226 = vadd.f32 0.0, %v1225
    %v1227 = vpop.f32.mrb[0].mxu0
    %v1228 = vpop.f32.mrb[0].mxu0
    %1229 = vdwg.mxu0
    %v1230 = vld [vmem:[%s4] sm:$0xf]
    %v1231 = vrot.slane %v1224, 4
    %v1232 = vadd.f32 %v1224, %v1231
    %v1233 = vrot.slane %v1232, 2
    %v1234 = vadd.f32 %v1232, %v1233
    %v1235 = vrot.slane %v1234, 1
    %v1236 = vadd.f32 %v1234, %v1235
    %v1237 = vrot.slane %v1226, 4
    %v1238 = vadd.f32 %v1226, %v1237
    %v1239 = vrot.slane %v1238, 2
    %v1240 = vadd.f32 %v1238, %v1239
    %v1241 = vrot.slane %v1240, 1
    %v1242 = vadd.f32 %v1240, %v1241
    %v1243 = vmul.f32 %v1236, %v919
    %v1244 = vmul.f32 %v1242, %v919
    %v1245 = vmul.f32 %v1224, %v1224
    %v1246 = vmul.f32 %v1226, %v1226
    %v1247 = vrot.slane %v1245, 4
    %v1248 = vadd.f32 %v1245, %v1247
    %v1249 = vrot.slane %v1248, 2
    %v1250 = vadd.f32 %v1248, %v1249
    %v1251 = vrot.slane %v1250, 1
    %v1252 = vadd.f32 %v1250, %v1251
    %v1253 = vrot.slane %v1246, 4
    %v1254 = vadd.f32 %v1246, %v1253
    %v1255 = vrot.slane %v1254, 2
    %v1256 = vadd.f32 %v1254, %v1255
    %v1257 = vrot.slane %v1256, 1
    %v1258 = vadd.f32 %v1256, %v1257
    %v1259 = vmul.f32 %v1252, %v919
    %v1260 = vmul.f32 %v1258, %v919
    %v1261 = vmul.f32 %v1243, %v1243
    %v1262 = vmul.f32 %v1244, %v1244
    %v1263 = vsub.f32 %v1259, %v1261
    %v1264 = vsub.f32 %v1260, %v1262
    %v1265 = vmax.f32 %v1263, 0.0
    %v1266 = vmax.f32 %v1264, 0.0
    %v1267 = vsub.f32 %v1224, %v1243
    %v1268 = vsub.f32 %v1226, %v1244
    %v1269 = vadd.f32 %v1265, 1e-05
    %v1270 = vadd.f32 %v1266, 1e-05
    %v1271 = vrsqrt.pop %v1269
    %v1272 = vrsqrt.pop %v1270
    %v1273 = vmul.f32 %v1267, %v1271
    %v1274 = vmul.f32 %v1268, %v1272
    %v1276 = vlaneseq
    %v1277 = vshrl.u32 %v1276, 7
    %v1278 = vsub.s32 0, %v1277
    %v1279 = vrot.slane %v1230, %v1278
    %v1280 = vlaneseq
    %v1281 = vshrl.u32 %v1280, 7
    %v1282 = vsub.s32 2, %v1281
    %v1283 = vrot.slane %v1230, %v1282
    %v1286 = vlaneseq
    %v1287 = vshrl.u32 %v1286, 7
    %v1288 = vsub.s32 0, %v1287
    %v1289 = vrot.slane %v1279, %v1288
    %v1290 = vlaneseq
    %v1291 = vshrl.u32 %v1290, 7
    %v1292 = vsub.s32 0, %v1291
    %v1293 = vrot.slane %v1283, %v1292
    %v1294 = vmul.f32 %v1273, %v1289
    %v1295 = vmul.f32 %v1274, %v1293
    %v1296 = vlaneseq
    %v1297 = vshrl.u32 %v1296, 7
    %v1298 = vsub.s32 1, %v1297
    %v1299 = vrot.slane %v1230, %v1298
    %v1300 = vlaneseq
    %v1301 = vshrl.u32 %v1300, 7
    %v1302 = vsub.s32 3, %v1301
    %v1303 = vrot.slane %v1230, %v1302
    %v1306 = vlaneseq
    %v1307 = vshrl.u32 %v1306, 7
    %v1308 = vsub.s32 1, %v1307
    %v1309 = vrot.slane %v1299, %v1308
    %v1310 = vlaneseq
    %v1311 = vshrl.u32 %v1310, 7
    %v1312 = vsub.s32 1, %v1311
    %v1313 = vrot.slane %v1303, %v1312
    %v1314 = vadd.f32 %v1294, %v1309
    %v1315 = vadd.f32 %v1295, %v1313
    %v1316 = vmax.f32 %v1314, 0.0
    %v1317 = vmax.f32 %v1315, 0.0
    %v1318 = vpack.c.bf16 %v1316, %v1316
    %v1319 = vpack.c.bf16 %v1317, %v1317
    %v1320 = vld [vmem:[#allocation5] sm:$0xf]
    %v1321 = vld [vmem:[#allocation5 + $0x4] sm:$0xf]
    %v1322 = vld [vmem:[#allocation5 + $0x8] sm:$0xf]
    %v1323 = vld [vmem:[#allocation5 + $0xc] sm:$0xf]
    %v1324 = vld [vmem:[#allocation5 + $0x10] sm:$0xf]
    %v1325 = vld [vmem:[#allocation5 + $0x14] sm:$0xf]
    %v1326 = vld [vmem:[#allocation5 + $0x18] sm:$0xf]
    %v1327 = vld [vmem:[#allocation5 + $0x1c] sm:$0xf]
    %v1328 = vld [vmem:[#allocation5 + $0x20] sm:$0xf]
    %v1329 = vld [vmem:[#allocation5 + $0x24] sm:$0xf]
    %v1330 = vld [vmem:[#allocation5 + $0x28] sm:$0xf]
    %v1331 = vld [vmem:[#allocation5 + $0x2c] sm:$0xf]
    %v1332 = vld [vmem:[#allocation5 + $0x30] sm:$0xf]
    %v1333 = vld [vmem:[#allocation5 + $0x34] sm:$0xf]
    %v1334 = vld [vmem:[#allocation5 + $0x38] sm:$0xf]
    %v1335 = vld [vmem:[#allocation5 + $0x3c] sm:$0xf]
    %v1336 = vld [vmem:[#allocation5 + $0x40] sm:$0xf]
    %v1337 = vld [vmem:[#allocation5 + $0x44] sm:$0xf]
    %v1338 = vld [vmem:[#allocation5 + $0x48] sm:$0xf]
    %v1339 = vld [vmem:[#allocation5 + $0x4c] sm:$0xf]
    %v1340 = vld [vmem:[#allocation5 + $0x50] sm:$0xf]
    %v1341 = vld [vmem:[#allocation5 + $0x54] sm:$0xf]
    %v1342 = vld [vmem:[#allocation5 + $0x58] sm:$0xf]
    %v1343 = vld [vmem:[#allocation5 + $0x5c] sm:$0xf]
    %v1344 = vld [vmem:[#allocation5 + $0x60] sm:$0xf]
    %v1345 = vld [vmem:[#allocation5 + $0x64] sm:$0xf]
    %v1346 = vld [vmem:[#allocation5 + $0x68] sm:$0xf]
    %v1347 = vld [vmem:[#allocation5 + $0x6c] sm:$0xf]
    %v1348 = vld [vmem:[#allocation5 + $0x70] sm:$0xf]
    %v1349 = vld [vmem:[#allocation5 + $0x74] sm:$0xf]
    %v1350 = vld [vmem:[#allocation5 + $0x78] sm:$0xf]
    %v1351 = vld [vmem:[#allocation5 + $0x7c] sm:$0xf]
    %v1384 = vunpack.c.l.b16 %v1320
    %v1385 = vunpack.c.l.b16 %v1321
    %v1386 = vunpack.c.l.b16 %v1322
    %v1387 = vunpack.c.l.b16 %v1323
    %v1388 = vunpack.c.l.b16 %v1324
    %v1389 = vunpack.c.l.b16 %v1325
    %v1390 = vunpack.c.l.b16 %v1326
    %v1391 = vunpack.c.l.b16 %v1327
    %v1392 = vunpack.c.l.b16 %v1328
    %v1393 = vunpack.c.l.b16 %v1329
    %v1394 = vunpack.c.l.b16 %v1330
    %v1395 = vunpack.c.l.b16 %v1331
    %v1396 = vunpack.c.l.b16 %v1332
    %v1397 = vunpack.c.l.b16 %v1333
    %v1398 = vunpack.c.l.b16 %v1334
    %v1399 = vunpack.c.l.b16 %v1335
    %v1400 = vunpack.c.l.b16 %v1336
    %v1401 = vunpack.c.l.b16 %v1337
    %v1402 = vunpack.c.l.b16 %v1338
    %v1403 = vunpack.c.l.b16 %v1339
    %v1404 = vunpack.c.l.b16 %v1340
    %v1405 = vunpack.c.l.b16 %v1341
    %v1406 = vunpack.c.l.b16 %v1342
    %v1407 = vunpack.c.l.b16 %v1343
    %v1408 = vunpack.c.l.b16 %v1344
    %v1409 = vunpack.c.l.b16 %v1345
    %v1410 = vunpack.c.l.b16 %v1346
    %v1411 = vunpack.c.l.b16 %v1347
    %v1412 = vunpack.c.l.b16 %v1348
    %v1413 = vunpack.c.l.b16 %v1349
    %v1414 = vunpack.c.l.b16 %v1350
    %v1415 = vunpack.c.l.b16 %v1351
    %v1416 = vpack.c.b16 %v1385, %v1384
    %v1417 = vpack.c.b16 %v1387, %v1386
    %v1418 = vpack.c.b16 %v1389, %v1388
    %v1419 = vpack.c.b16 %v1391, %v1390
    %v1420 = vpack.c.b16 %v1393, %v1392
    %v1421 = vpack.c.b16 %v1395, %v1394
    %v1422 = vpack.c.b16 %v1397, %v1396
    %v1423 = vpack.c.b16 %v1399, %v1398
    %v1424 = vpack.c.b16 %v1401, %v1400
    %v1425 = vpack.c.b16 %v1403, %v1402
    %v1426 = vpack.c.b16 %v1405, %v1404
    %v1427 = vpack.c.b16 %v1407, %v1406
    %v1428 = vpack.c.b16 %v1409, %v1408
    %v1429 = vpack.c.b16 %v1411, %v1410
    %v1430 = vpack.c.b16 %v1413, %v1412
    %v1431 = vpack.c.b16 %v1415, %v1414
    %1448 = vmatprep.subr.bf16.mxu0 0
    %1449 = vmatpush1.bf16.msra.mxu0 %v1416
    %1450 = vmatprep.subr.bf16.mxu0 0
    %1451 = vmatpush1.bf16.msra.mxu0 %v1417
    %1452 = vmatprep.subr.bf16.mxu0 0
    %1453 = vmatpush1.bf16.msra.mxu0 %v1418
    %1454 = vmatprep.subr.bf16.mxu0 0
    %1455 = vmatpush1.bf16.msra.mxu0 %v1419
    %1456 = vmatprep.subr.bf16.mxu0 0
    %1457 = vmatpush1.bf16.msra.mxu0 %v1420
    %1458 = vmatprep.subr.bf16.mxu0 0
    %1459 = vmatpush1.bf16.msra.mxu0 %v1421
    %1460 = vmatprep.subr.bf16.mxu0 0
    %1461 = vmatpush1.bf16.msra.mxu0 %v1422
    %1462 = vmatprep.subr.bf16.mxu0 0
    %1463 = vmatpush1.bf16.msra.mxu0 %v1423
    %1464 = vmatprep.subr.bf16.mxu0 0
    %1465 = vmatpush1.bf16.msra.mxu0 %v1424
    %1466 = vmatprep.subr.bf16.mxu0 0
    %1467 = vmatpush1.bf16.msra.mxu0 %v1425
    %1468 = vmatprep.subr.bf16.mxu0 0
    %1469 = vmatpush1.bf16.msra.mxu0 %v1426
    %1470 = vmatprep.subr.bf16.mxu0 0
    %1471 = vmatpush1.bf16.msra.mxu0 %v1427
    %1472 = vmatprep.subr.bf16.mxu0 0
    %1473 = vmatpush1.bf16.msra.mxu0 %v1428
    %1474 = vmatprep.subr.bf16.mxu0 0
    %1475 = vmatpush1.bf16.msra.mxu0 %v1429
    %1476 = vmatprep.subr.bf16.mxu0 0
    %1477 = vmatpush1.bf16.msra.mxu0 %v1430
    %1478 = vmatprep.subr.bf16.mxu0 0
    %1479 = vmatpush1.bf16.msra.mxu0 %v1431
    %1480 = vmatprep.mubr.bf16.mxu0 %v1319
    %1481 = vmatmul.mubr.bf16.gmra.mrb[0].mxu0 %v1318
    %v1482 = vpop.f32.mrb[0].mxu0
    %v1483 = vadd.f32 0.0, %v1482
    %v1484 = vpop.f32.mrb[0].mxu0
    %v1485 = vpop.f32.mrb[0].mxu0
    %v1486 = vpop.f32.mrb[0].mxu0
    %1487 = vdwg.mxu0
    %v1488 = vld [vmem:[%s6] sm:$0x3]
    %v1489 = vrot.slane %v1483, 4
    %v1490 = vadd.f32 %v1483, %v1489
    %v1491 = vrot.slane %v1490, 2
    %v1492 = vadd.f32 %v1490, %v1491
    %v1493 = vrot.slane %v1492, 1
    %v1494 = vadd.f32 %v1492, %v1493
    %v1495 = vmul.f32 %v1494, %v919
    %v1496 = vmul.f32 %v1483, %v1483
    %v1497 = vrot.slane %v1496, 4
    %v1498 = vadd.f32 %v1496, %v1497
    %v1499 = vrot.slane %v1498, 2
    %v1500 = vadd.f32 %v1498, %v1499
    %v1501 = vrot.slane %v1500, 1
    %v1502 = vadd.f32 %v1500, %v1501
    %v1503 = vmul.f32 %v1502, %v919
    %v1504 = vmul.f32 %v1495, %v1495
    %v1505 = vsub.f32 %v1503, %v1504
    %v1506 = vmax.f32 %v1505, 0.0
    %v1507 = vsub.f32 %v1483, %v1495
    %v1508 = vadd.f32 %v1506, 1e-05
    %v1509 = vrsqrt.pop %v1508
    %v1510 = vmul.f32 %v1507, %v1509
    %v1511 = vlaneseq
    %v1512 = vshrl.u32 %v1511, 7
    %v1513 = vsub.s32 0, %v1512
    %v1514 = vrot.slane %v1488, %v1513
    %v1515 = vmul.f32 %v1510, %v1514
    %v1516 = vlaneseq
    %v1517 = vshrl.u32 %v1516, 7
    %v1518 = vsub.s32 1, %v1517
    %v1519 = vrot.slane %v1488, %v1518
    %v1520 = vadd.f32 %v1515, %v1519
    %v1521 = vlaneseq
    %v1522 = vand.u32 %v1521, 127
    %vm1523 = vcmp.lt.s32.totalorder %v1522, 10
    %v1524 = vsel %vm1523, %v1520, -1e+30
    %1525 = vmax.xlane.f32.xlu0 %v1524
    %v1526 = vpop.xlane.xlu0 %1525
    %v1527 = vsub.f32 %v1524, %v1526
    %v1528 = vmul.f32 %v1527, 1.442695
    %v1529 = vpow.pop %v1528
    %1530 = vadd.xlane.f32.xlu0 %v1529
    %v1531 = vpop.xlane.xlu0 %1530
    %v1532 = vlog2.pop %v1531
    %v1533 = vmul.f32 %v1532, 0.6931472
    %v1534 = vadd.f32 %v1533, %v1526
    %v1535 = vsub.f32 %v1524, %v1534
    %1536 = vst [vmem:[#allocation7] sm:$0xff] %v1535
    // Predicated region
    $region38: #{net_forward.1} parent=1 // pred_check
      _
    $region39: #{net_forward.1} parent=1 // pred_check_branch
      %1538 = sbr.rel (0) target = $region41
    $region40: #{net_forward.1} parent=1 // pred_region
      %s1540 = ssub.s32 128, 128
      %1541 = vsyncadd [#allocation4], %s1540
      %s1543 = sshll.u32 [#allocation7], 4
      %s1544 = int_to_ptr.vmem [resolvable:$true] %s1543
      %1546 = dma.vmem_to_hbm [thread:$0]  %s1544, 128, %s7, [#allocation4]
    $region41: #{net_forward.1} parent=1 // pred_fallthru
      _
    // Predicated region
    $region42: #{net_forward.1} parent=1 // pred_check
      _
    $region43: #{net_forward.1} parent=1 // pred_check_branch
      %1548 = sbr.rel (0) target = $region45
    $region44: #{net_forward.1} parent=1 // pred_region
      %1549 = dma.done [#allocation4], 128
    $region45: #{net_forward.1} parent=1 // pred_fallthru
      _
    %1550 = vsyncpa [#allocation3], 1
    %1551 = vsyncpa [#allocation6], 1
    %1552 = vsyncpa [#allocation4], 1

</llo_original>
